<compile_context>
chip_gen: v7x
topology: tpu7x:2x2x1
jax: 0.10.0
libtpu: 0.0.40
codegen_flags: <defaults>
</compile_context>

<pallas_src>
import functools

import jax
import jax.numpy as jnp
from jax import lax
from jax.experimental import pallas as pl
from jax.experimental.pallas import tpu as pltpu

_EPS = 1e-5


def _round_up(n, m):
    return (n + m - 1) // m * m


def _leaky_relu(x, slope=0.2):
    return jnp.where(x > 0, x, slope * x)


def _pad2(a, rows, cols):
    r, c = a.shape
    return jnp.pad(a, ((0, rows - r), (0, cols - c)))


def _vmem_budget_bytes():
    cap = 64 * 1024 * 1024                      # conservative default (v7x physical)
    try:
        cap = int(pltpu.get_tpu_info().vmem_capacity_bytes)
    except Exception:
        pass
    return (cap * 3) // 4                       # ~48 MiB on v7x, ~96 MiB on v5e/v6e


# ---------------------------------------------------------------------------
# Shared in-kernel helpers
# ---------------------------------------------------------------------------
def _mlp_body(x, w1_ref, w2_ref, bias_ref, h1p, h2p):
    """Linear -> LeakyReLU(0.2) -> Linear (pre-BN); f32 accumulation on the MXU."""
    b1 = bias_ref[:, 0:h1p]
    b2 = bias_ref[:, h1p:h1p + h2p]
    h1 = _leaky_relu(
        jnp.dot(x, w1_ref[...], preferred_element_type=jnp.float32) + b1)
    return jnp.dot(h1.astype(w2_ref.dtype), w2_ref[...],
                   preferred_element_type=jnp.float32) + b2


def _accumulate_stats(stats_ref, h2, i, *, tb, b_true, n_tiles):
    """Accumulate batch sum / sum-of-squares; the iota row mask only runs on the
    last (partially padded) tile."""
    def _acc(v):
        stats_ref[0:1, :] += jnp.sum(v, axis=0, keepdims=True)
        stats_ref[1:2, :] += jnp.sum(v * v, axis=0, keepdims=True)

    if b_true == n_tiles * tb:                  # static: no padded rows at all
        _acc(h2)
    else:
        @pl.when(i < n_tiles - 1)
        def _():
            _acc(h2)

        @pl.when(i == n_tiles - 1)
        def _():
            row = lax.broadcasted_iota(jnp.int32, h2.shape, 0) + i * tb
            _acc(jnp.where(row < b_true, h2, 0.0))


def _bn_fold(stats, gamma, beta, inv_b):
    """Fold batch-stat BatchNorm + affine into per-feature scale / shift."""
    mean = stats[0:1, :] * inv_b
    var = stats[1:2, :] * inv_b - mean * mean   # biased variance (PyTorch BN)
    rstd = lax.rsqrt(var + _EPS)                # EUP slot
    scale = rstd * gamma
    shift = beta - mean * scale
    return scale, shift


def _head(h2, scale, shift, p2_ref, h2p):
    """Folded BN + LeakyReLU + Linear(H2, 1) -> (features, lane-dense logit row)."""
    h = _leaky_relu(h2 * scale + shift)
    wc = p2_ref[:, 2 * h2p:3 * h2p]             # (1, H2p) classifier weight row
    bc = p2_ref[:, 3 * h2p:3 * h2p + 1]         # (1, 1)  classifier bias
    # (1, H2p) x (TB, H2p)^T on the (otherwise idle) MXU -> lane-dense (1, TB).
    logit = lax.dot_general(wc, h, (((1,), (1,)), ((), ())),
                            preferred_element_type=jnp.float32) + bc
    return h, logit


# ---------------------------------------------------------------------------
# Fused kernel: grid = (phase, batch tile), h2 resident in VMEM scratch.
# ---------------------------------------------------------------------------
def _fused_kernel(x_ref, w1_ref, w2_ref, bias_ref, p2_ref,
                  feat_ref, logit_ref,
                  h2_scr, stats_scr, bn_scr,
                  *, b_true, tb, h1p, h2p, n_tiles):
    p = pl.program_id(0)          # 0: linears + stats, 1: BN + classifier
    i = pl.program_id(1)          # batch tile

    @pl.when(p == 0)
    def _pass1():
        @pl.when(i == 0)
        def _():
            stats_scr[...] = jnp.zeros_like(stats_scr)

        h2 = _mlp_body(x_ref[...], w1_ref, w2_ref, bias_ref, h1p, h2p)
        h2_scr[i] = h2            # stays resident in VMEM (no HBM roundtrip)
        _accumulate_stats(stats_scr, h2, i, tb=tb, b_true=b_true, n_tiles=n_tiles)

    @pl.when(p == 1)
    def _pass2():
        @pl.when(i == 0)
        def _():
            scale, shift = _bn_fold(stats_scr[...], p2_ref[:, 0:h2p],
                                    p2_ref[:, h2p:2 * h2p], 1.0 / b_true)
            bn_scr[0:1, :] = scale
            bn_scr[1:2, :] = shift

        h, logit = _head(h2_scr[i], bn_scr[0:1, :], bn_scr[1:2, :], p2_ref, h2p)
        feat_ref[...] = h.astype(feat_ref.dtype)
        logit_ref[...] = logit.astype(logit_ref.dtype)


# ---------------------------------------------------------------------------
# Two-call fallback (very large batches): h2 roundtrips through HBM once.
# ---------------------------------------------------------------------------
def _stats_kernel(x_ref, w1_ref, w2_ref, bias_ref, h2_ref, stats_ref,
                  *, b_true, tb, h1p, h2p, n_tiles):
    i = pl.program_id(0)

    @pl.when(i == 0)
    def _():
        stats_ref[...] = jnp.zeros_like(stats_ref)

    h2 = _mlp_body(x_ref[...], w1_ref, w2_ref, bias_ref, h1p, h2p)
    h2_ref[...] = h2
    _accumulate_stats(stats_ref, h2, i, tb=tb, b_true=b_true, n_tiles=n_tiles)


def _bn_head_kernel(h2_ref, stats_ref, p2_ref, feat_ref, logit_ref,
                    *, b_true, h2p):
    scale, shift = _bn_fold(stats_ref[...], p2_ref[:, 0:h2p],
                            p2_ref[:, h2p:2 * h2p], 1.0 / b_true)
    h, logit = _head(h2_ref[...], scale, shift, p2_ref, h2p)
    feat_ref[...] = h.astype(feat_ref.dtype)
    logit_ref[...] = logit.astype(logit_ref.dtype)


# ---------------------------------------------------------------------------
# Wrapper
# ---------------------------------------------------------------------------
@functools.partial(jax.jit, static_argnames=("batch_tile", "mxu_dtype", "fuse"))
def discriminator_forward(x, params, *, batch_tile=1024, mxu_dtype=jnp.bfloat16,
                          fuse=None):
    """Returns (features, logit) matching the PyTorch module's forward
    (BatchNorm1d in training mode: biased batch statistics, eps=1e-5)."""
    B, D = x.shape
    H1 = params["w1"].shape[1]
    H2 = params["w2"].shape[1]

    # Lane-pad feature dims to 128; batch tiles are 128-row multiples so the
    # logit output can be stored as a lane-dense (1, B_pad) row.
    Dp, H1p, H2p = _round_up(D, 128), _round_up(H1, 128), _round_up(H2, 128)
    TB = min(int(batch_tile), 1024)
    TB = _round_up(max(TB, 128), 128)
    TB = min(TB, _round_up(B, 128))
    B_pad = _round_up(B, TB)
    n_tiles = B_pad // TB

    itemsize = jnp.dtype(mxu_dtype).itemsize
    budget = _vmem_budget_bytes()

    x_p = _pad2(x, B_pad, Dp).astype(mxu_dtype)
    w1_p = _pad2(params["w1"], Dp, H1p).astype(mxu_dtype)
    w2_p = _pad2(params["w2"], H1p, H2p).astype(mxu_dtype)

    # Small params merged into two lane-padded slabs (2 DMAs instead of 7).
    bias_slab = jnp.concatenate(
        [_pad2(params["b1"], 1, H1p), _pad2(params["b2"], 1, H2p)],
        axis=1).astype(jnp.float32)
    p2_slab = jnp.concatenate(
        [_pad2(params["g2"], 1, H2p),
         _pad2(params["be2"], 1, H2p),
         _pad2(params["wc"], 1, H2p),
         jnp.broadcast_to(params["bc"].astype(jnp.float32), (1, 128))],
        axis=1).astype(jnp.float32)

    # Fused-path VMEM footprint: double-buffered pipeline blocks + resident h2.
    fused_vmem = (2 * TB * Dp * itemsize          # x tiles
                  + 2 * Dp * H1p * itemsize       # w1 (DMA'd once, 2 buffers)
                  + 2 * H1p * H2p * itemsize      # w2
                  + 2 * (H1p + H2p) * 4           # bias slab
                  + 2 * (3 * H2p + 128) * 4       # p2 slab
                  + 2 * TB * H2p * 4              # features out
                  + 2 * TB * 4                    # logit out
                  + B_pad * H2p * 4               # resident h2 scratch
                  + 4 * H2p * 4)                  # stats + folded-BN scratch
    if fuse is None:
        fuse = fused_vmem + (2 << 20) <= budget

    kw = dict(b_true=B, tb=TB, h1p=H1p, h2p=H2p, n_tiles=n_tiles)

    if fuse:
        feat_pad, logit_pad = pl.pallas_call(
            functools.partial(_fused_kernel, **kw),
            out_shape=(
                jax.ShapeDtypeStruct((B_pad, H2p), jnp.float32),
                jax.ShapeDtypeStruct((1, B_pad), jnp.float32),
            ),
            grid=(2, n_tiles),
            in_specs=[
                # x: walks tiles in phase 0, parks on the last tile in phase 1
                # (no redundant DMA).
                pl.BlockSpec((TB, Dp),
                             lambda p, i: ((1 - p) * i + p * (n_tiles - 1), 0)),
                pl.BlockSpec((Dp, H1p), lambda p, i: (0, 0)),
                pl.BlockSpec((H1p, H2p), lambda p, i: (0, 0)),
                pl.BlockSpec((1, H1p + H2p), lambda p, i: (0, 0)),
                pl.BlockSpec((1, 3 * H2p + 128), lambda p, i: (0, 0)),
            ],
            out_specs=(
                # Constant block index during phase 0 (never written there), so
                # each output block is written back exactly once with phase-1 data.
                pl.BlockSpec((TB, H2p), lambda p, i: (i * p, 0)),
                pl.BlockSpec((1, TB), lambda p, i: (0, i * p)),
            ),
            scratch_shapes=[
                pltpu.VMEM((n_tiles, TB, H2p), jnp.float32),   # resident h2
                pltpu.VMEM((2, H2p), jnp.float32),             # [sum; sum_sq]
                pltpu.VMEM((2, H2p), jnp.float32),             # folded [scale; shift]
            ],
            compiler_params=pltpu.CompilerParams(
                dimension_semantics=("arbitrary", "arbitrary"),
                vmem_limit_bytes=budget),
        )(x_p, w1_p, w2_p, bias_slab, p2_slab)
    else:
        h2_pre, stats = pl.pallas_call(
            functools.partial(_stats_kernel, **kw),
            out_shape=(
                jax.ShapeDtypeStruct((B_pad, H2p), jnp.float32),
                jax.ShapeDtypeStruct((2, H2p), jnp.float32),
            ),
            grid=(n_tiles,),
            in_specs=[
                pl.BlockSpec((TB, Dp), lambda i: (i, 0)),
                pl.BlockSpec((Dp, H1p), lambda i: (0, 0)),
                pl.BlockSpec((H1p, H2p), lambda i: (0, 0)),
                pl.BlockSpec((1, H1p + H2p), lambda i: (0, 0)),
            ],
            out_specs=(
                pl.BlockSpec((TB, H2p), lambda i: (i, 0)),
                pl.BlockSpec((2, H2p), lambda i: (0, 0)),
            ),
            compiler_params=pltpu.CompilerParams(
                dimension_semantics=("arbitrary",),
                vmem_limit_bytes=budget),
        )(x_p, w1_p, w2_p, bias_slab)

        feat_pad, logit_pad = pl.pallas_call(
            functools.partial(_bn_head_kernel, b_true=B, h2p=H2p),
            out_shape=(
                jax.ShapeDtypeStruct((B_pad, H2p), jnp.float32),
                jax.ShapeDtypeStruct((1, B_pad), jnp.float32),
            ),
            grid=(n_tiles,),
            in_specs=[
                pl.BlockSpec((TB, H2p), lambda i: (i, 0)),
                pl.BlockSpec((2, H2p), lambda i: (0, 0)),
                pl.BlockSpec((1, 3 * H2p + 128), lambda i: (0, 0)),
            ],
            out_specs=(
                pl.BlockSpec((TB, H2p), lambda i: (i, 0)),
                pl.BlockSpec((1, TB), lambda i: (0, i)),
            ),
            compiler_params=pltpu.CompilerParams(
                dimension_semantics=("parallel",),
                vmem_limit_bytes=budget),
        )(h2_pre, stats, p2_slab)

    features = feat_pad[:B, :H2]
    logit = logit_pad[0, :B]          # logit.view(-1) equivalent
    return features, logit


# ---------------------------------------------------------------------------
# Params / reference
# ---------------------------------------------------------------------------
def init_params(key, input_dim, hidden_dims):
    """Deterministic synthetic init (PyTorch-style uniform fan-in bounds)."""
    assert len(hidden_dims) == 2, "this kernel covers hidden_dims=[H1, H2]"
    h1, h2 = hidden_dims
    ks = jax.random.split(key, 8)

    def lin(kw, kb, fan_in, fan_out):
        bound = 1.0 / float(jnp.sqrt(fan_in))
        w = jax.random.uniform(kw, (fan_in, fan_out), jnp.float32, -bound, bound)
        b = jax.random.uniform(kb, (1, fan_out), jnp.float32, -bound, bound)
        return w, b

    w1, b1 = lin(ks[0], ks[1], input_dim, h1)
    w2, b2 = lin(ks[2], ks[3], h1, h2)
    wc_t, bc = lin(ks[4], ks[5], h2, 1)          # classifier
    wc = wc_t.T                                   # stored as (1, H2) row
    g2 = 1.0 + 0.1 * jax.random.normal(ks[6], (1, h2), jnp.float32)
    be2 = 0.1 * jax.random.normal(ks[7], (1, h2), jnp.float32)
    return dict(w1=w1, b1=b1, w2=w2, b2=b2, g2=g2, be2=be2, wc=wc, bc=bc)


def reference_forward(x, p, mxu_dtype=jnp.float32):
    """Pure-JAX reference mirroring the PyTorch forward (BN with batch stats).
    Casts matmul inputs to `mxu_dtype` like the kernel; everything else f32."""
    d = mxu_dtype
    h1 = _leaky_relu(jnp.dot(x.astype(d), p["w1"].astype(d),
                             preferred_element_type=jnp.float32) + p["b1"])
    h2 = jnp.dot(h1.astype(d), p["w2"].astype(d),
                 preferred_element_type=jnp.float32) + p["b2"]
    mean = jnp.mean(h2, axis=0, keepdims=True)
    var = jnp.mean((h2 - mean) ** 2, axis=0, keepdims=True)   # biased variance
    h2 = (h2 - mean) * lax.rsqrt(var + _EPS) * p["g2"] + p["be2"]
    h2 = _leaky_relu(h2)
    logit = jnp.sum(h2 * p["wc"], axis=-1) + p["bc"][0, 0]
    return h2, logit


if __name__ == "__main__":
    # Small shapes consistent with the module (2-D input (B, input_dim)).
    B, INPUT_DIM = 200, 32
    HIDDEN_DIMS = [64, 32]

    key = jax.random.PRNGKey(0)
    kx, kp = jax.random.split(key)
    x = jax.random.normal(kx, (B, INPUT_DIM), jnp.float32)
    params = init_params(kp, INPUT_DIM, HIDDEN_DIMS)

    # 1) Fused path, f32 MXU, multi-tile grid (TB=128 -> 2 tiles) exercising the
    #    resident-h2 scratch, resident stats accumulator and padded-row mask.
    feat, logit = discriminator_forward(x, params, batch_tile=128,
                                        mxu_dtype=jnp.float32)
    jax.block_until_ready((feat, logit))
    feat_ref, logit_ref = reference_forward(x, params, jnp.float32)
    assert feat.shape == (B, HIDDEN_DIMS[-1])
    assert logit.shape == (B,)
    assert jnp.allclose(feat, feat_ref, atol=2e-4, rtol=2e-4)
    assert jnp.allclose(logit, logit_ref, atol=2e-4, rtol=2e-4)

    # 2) Fused path, default bf16 MXU inputs (full-rate MXU on v5e/v6e/v7x),
    #    compared against a bf16-matmul reference.
    feat, logit = discriminator_forward(x, params)
    jax.block_until_ready((feat, logit))
    feat_ref, logit_ref = reference_forward(x, params, jnp.bfloat16)
    assert jnp.allclose(feat, feat_ref, atol=3e-2, rtol=3e-2)
    assert jnp.allclose(logit, logit_ref, atol=3e-2, rtol=3e-2)

    # 3) Forced two-call fallback path (the very-large-batch route), f32.
    feat, logit = discriminator_forward(x, params, batch_tile=128,
                                        mxu_dtype=jnp.float32, fuse=False)
    jax.block_until_ready((feat, logit))
    feat_ref, logit_ref = reference_forward(x, params, jnp.float32)
    assert jnp.allclose(feat, feat_ref, atol=2e-4, rtol=2e-4)
    assert jnp.allclose(logit, logit_ref, atol=2e-4, rtol=2e-4)

    print("KERNEL_OK")
</pallas_src>

<mosaic_0001>
module attributes {stable_mosaic.version = 11 : i64} {
  func.func @_fused_kernel(%arg0: i32, %arg1: i32, %arg2: memref<128x128xf32, #tpu.memory_space<vmem>>, %arg3: memref<128x128xf32, #tpu.memory_space<vmem>>, %arg4: memref<128x128xf32, #tpu.memory_space<vmem>>, %arg5: memref<1x256xf32, #tpu.memory_space<vmem>>, %arg6: memref<1x512xf32, #tpu.memory_space<vmem>>, %arg7: memref<128x128xf32, #tpu.memory_space<vmem>>, %arg8: memref<1x128xf32, #tpu.memory_space<vmem>>, %arg9: memref<2x128x128xf32, #tpu.memory_space<vmem>>, %arg10: memref<2x128xf32, #tpu.memory_space<vmem>>, %arg11: memref<2x128xf32, #tpu.memory_space<vmem>>) attributes {dimension_semantics = [#tpu.dimension_semantics<arbitrary>, #tpu.dimension_semantics<arbitrary>], iteration_bounds = array<i64: 2, 2>, scalar_prefetch = 0 : i64, scratch_operands = 3 : i64, tpu.core_type = #tpu.core_type<tc>, window_params = [{transform_indices = @transform_0, window_bounds = array<i64: 128, 128>}, {pipeline_mode = #tpu.pipeline_mode<synchronous>, transform_indices = @transform_1, window_bounds = array<i64: 128, 128>}, {pipeline_mode = #tpu.pipeline_mode<synchronous>, transform_indices = @transform_2, window_bounds = array<i64: 128, 128>}, {pipeline_mode = #tpu.pipeline_mode<synchronous>, transform_indices = @transform_3, window_bounds = array<i64: 1, 256>}, {pipeline_mode = #tpu.pipeline_mode<synchronous>, transform_indices = @transform_4, window_bounds = array<i64: 1, 512>}, {transform_indices = @transform_5, window_bounds = array<i64: 128, 128>}, {transform_indices = @transform_6, window_bounds = array<i64: 1, 128>}]} {
    %c0_i32 = arith.constant 0 : i32
    %0 = arith.cmpi eq, %arg0, %c0_i32 : i32
    %1 = arith.extui %0 : i1 to i32
    %c0_i32_0 = arith.constant 0 : i32
    %2 = arith.cmpi ne, %1, %c0_i32_0 : i32
    scf.if %2 {
      %c0_i32_2 = arith.constant 0 : i32
      %6 = arith.cmpi eq, %arg1, %c0_i32_2 : i32
      %7 = arith.extui %6 : i1 to i32
      %c0_i32_3 = arith.constant 0 : i32
      %8 = arith.cmpi ne, %7, %c0_i32_3 : i32
      scf.if %8 {
        %cst_21 = arith.constant 0.000000e+00 : f32
        %35 = vector.broadcast %cst_21 : f32 to vector<2x128xf32>
        %c0_22 = arith.constant 0 : index
        %c0_23 = arith.constant 0 : index
        %36 = vector.load %arg10[%c0_22, %c0_23] : memref<2x128xf32, #tpu.memory_space<vmem>>, vector<2x128xf32>
        tpu.vector_store %arg10[%c0_22, %c0_23], %35 {strides = array<i32>} : memref<2x128xf32, #tpu.memory_space<vmem>>, vector<2x128xf32>,
      } else {
      }
      %c0 = arith.constant 0 : index
      %c0_4 = arith.constant 0 : index
      %9 = vector.load %arg2[%c0, %c0_4] : memref<128x128xf32, #tpu.memory_space<vmem>>, vector<128x128xf32>
      %c0_5 = arith.constant 0 : index
      %c0_6 = arith.constant 0 : index
      %10 = vector.load %arg5[%c0_5, %c0_6] : memref<1x256xf32, #tpu.memory_space<vmem>>, vector<1x128xf32>
      %c0_7 = arith.constant 0 : index
      %c128 = arith.constant 128 : index
      %11 = vector.load %arg5[%c0_7, %c128] : memref<1x256xf32, #tpu.memory_space<vmem>>, vector<1x128xf32>
      %c0_8 = arith.constant 0 : index
      %c0_9 = arith.constant 0 : index
      %12 = vector.load %arg3[%c0_8, %c0_9] : memref<128x128xf32, #tpu.memory_space<vmem>>, vector<128x128xf32>
      %cst = arith.constant dense<0.000000e+00> : vector<128x128xf32>
      %13 = tpu.matmul %9, %12, %cst {dimension_numbers = #tpu.dot_dimension_numbers<[1], [0], [0], [1], [0, 0, 1, 1], [], []>} : vector<128x128xf32>, vector<128x128xf32>, vector<128x128xf32> -> vector<128x128xf32>
      %14 = vector.broadcast %10 : vector<1x128xf32> to vector<128x128xf32>
      %15 = arith.addf %13, %14 : vector<128x128xf32>
      %cst_10 = arith.constant 0.000000e+00 : f32
      %16 = vector.broadcast %cst_10 : f32 to vector<128x128xf32>
      %17 = arith.cmpf ogt, %15, %16 : vector<128x128xf32>
      %cst_11 = arith.constant 2.000000e-01 : f32
      %18 = vector.broadcast %cst_11 : f32 to vector<128x128xf32>
      %19 = arith.mulf %18, %15 : vector<128x128xf32>
      %20 = arith.select %17, %15, %19 : vector<128x128xi1>, vector<128x128xf32>
      %c0_12 = arith.constant 0 : index
      %c0_13 = arith.constant 0 : index
      %21 = vector.load %arg4[%c0_12, %c0_13] : memref<128x128xf32, #tpu.memory_space<vmem>>, vector<128x128xf32>
      %cst_14 = arith.constant dense<0.000000e+00> : vector<128x128xf32>
      %22 = tpu.matmul %20, %21, %cst_14 {dimension_numbers = #tpu.dot_dimension_numbers<[1], [0], [0], [1], [0, 0, 1, 1], [], []>} : vector<128x128xf32>, vector<128x128xf32>, vector<128x128xf32> -> vector<128x128xf32>
      %23 = vector.broadcast %11 : vector<1x128xf32> to vector<128x128xf32>
      %24 = arith.addf %22, %23 : vector<128x128xf32>
      %25 = arith.index_cast %arg1 : i32 to index
      %c0_15 = arith.constant 0 : index
      %c0_16 = arith.constant 0 : index
      %26 = vector.load %arg9[%25, %c0_15, %c0_16] : memref<2x128x128xf32, #tpu.memory_space<vmem>>, vector<1x128x128xf32>
      %27 = vector.shape_cast %26 : vector<1x128x128xf32> to vector<128x128xf32>
      %28 = vector.shape_cast %24 : vector<128x128xf32> to vector<1x128x128xf32>
      tpu.vector_store %arg9[%25, %c0_15, %c0_16], %28 {strides = array<i32>} : memref<2x128x128xf32, #tpu.memory_space<vmem>>, vector<1x128x128xf32>,
      %c1_i32_17 = arith.constant 1 : i32
      %29 = arith.cmpi slt, %arg1, %c1_i32_17 : i32
      %30 = arith.extui %29 : i1 to i32
      %c0_i32_18 = arith.constant 0 : i32
      %31 = arith.cmpi ne, %30, %c0_i32_18 : i32
      scf.if %31 {
        %c0_21 = arith.constant 0 : index
        %c0_22 = arith.constant 0 : index
        %35 = vector.load %arg10[%c0_21, %c0_22] : memref<2x128xf32, #tpu.memory_space<vmem>>, vector<1x128xf32>
        %cst_23 = arith.constant dense<0.000000e+00> : vector<128xf32>
        %36 = vector.multi_reduction <add>, %24, %cst_23 [0] : vector<128x128xf32> to vector<128xf32>
        %37 = vector.shape_cast %36 : vector<128xf32> to vector<1x128xf32>
        %38 = arith.addf %35, %37 : vector<1x128xf32>
        %c0_24 = arith.constant 0 : index
        %c0_25 = arith.constant 0 : index
        %39 = vector.load %arg10[%c0_24, %c0_25] : memref<2x128xf32, #tpu.memory_space<vmem>>, vector<1x128xf32>
        tpu.vector_store %arg10[%c0_24, %c0_25], %38 {strides = array<i32>} : memref<2x128xf32, #tpu.memory_space<vmem>>, vector<1x128xf32>,
        %c1 = arith.constant 1 : index
        %c0_26 = arith.constant 0 : index
        %40 = vector.load %arg10[%c1, %c0_26] : memref<2x128xf32, #tpu.memory_space<vmem>>, vector<1x128xf32>
        %41 = arith.mulf %24, %24 : vector<128x128xf32>
        %cst_27 = arith.constant dense<0.000000e+00> : vector<128xf32>
        %42 = vector.multi_reduction <add>, %41, %cst_27 [0] : vector<128x128xf32> to vector<128xf32>
        %43 = vector.shape_cast %42 : vector<128xf32> to vector<1x128xf32>
        %44 = arith.addf %40, %43 : vector<1x128xf32>
        %c1_28 = arith.constant 1 : index
        %c0_29 = arith.constant 0 : index
        %45 = vector.load %arg10[%c1_28, %c0_29] : memref<2x128xf32, #tpu.memory_space<vmem>>, vector<1x128xf32>
        tpu.vector_store %arg10[%c1_28, %c0_29], %44 {strides = array<i32>} : memref<2x128xf32, #tpu.memory_space<vmem>>, vector<1x128xf32>,
      } else {
      }
      %c1_i32_19 = arith.constant 1 : i32
      %32 = arith.cmpi eq, %arg1, %c1_i32_19 : i32
      %33 = arith.extui %32 : i1 to i32
      %c0_i32_20 = arith.constant 0 : i32
      %34 = arith.cmpi ne, %33, %c0_i32_20 : i32
      scf.if %34 {
        %35 = tpu.iota {dimensions = array<i32: 0>} : vector<128x128xi32>
        %c128_i32 = arith.constant 128 : i32
        %36 = arith.muli %arg1, %c128_i32 : i32
        %37 = vector.broadcast %36 : i32 to vector<128x128xi32>
        %38 = arith.addi %35, %37 : vector<128x128xi32>
        %c200_i32 = arith.constant 200 : i32
        %39 = vector.broadcast %c200_i32 : i32 to vector<128x128xi32>
        %40 = arith.cmpi slt, %38, %39 : vector<128x128xi32>
        %cst_21 = arith.constant 0.000000e+00 : f32
        %41 = vector.broadcast %cst_21 : f32 to vector<128x128xf32>
        %42 = arith.select %40, %24, %41 : vector<128x128xi1>, vector<128x128xf32>
        %c0_22 = arith.constant 0 : index
        %c0_23 = arith.constant 0 : index
        %43 = vector.load %arg10[%c0_22, %c0_23] : memref<2x128xf32, #tpu.memory_space<vmem>>, vector<1x128xf32>
        %cst_24 = arith.constant dense<0.000000e+00> : vector<128xf32>
        %44 = vector.multi_reduction <add>, %42, %cst_24 [0] : vector<128x128xf32> to vector<128xf32>
        %45 = vector.shape_cast %44 : vector<128xf32> to vector<1x128xf32>
        %46 = arith.addf %43, %45 : vector<1x128xf32>
        %c0_25 = arith.constant 0 : index
        %c0_26 = arith.constant 0 : index
        %47 = vector.load %arg10[%c0_25, %c0_26] : memref<2x128xf32, #tpu.memory_space<vmem>>, vector<1x128xf32>
        tpu.vector_store %arg10[%c0_25, %c0_26], %46 {strides = array<i32>} : memref<2x128xf32, #tpu.memory_space<vmem>>, vector<1x128xf32>,
        %c1 = arith.constant 1 : index
        %c0_27 = arith.constant 0 : index
        %48 = vector.load %arg10[%c1, %c0_27] : memref<2x128xf32, #tpu.memory_space<vmem>>, vector<1x128xf32>
        %49 = arith.mulf %42, %42 : vector<128x128xf32>
        %cst_28 = arith.constant dense<0.000000e+00> : vector<128xf32>
        %50 = vector.multi_reduction <add>, %49, %cst_28 [0] : vector<128x128xf32> to vector<128xf32>
        %51 = vector.shape_cast %50 : vector<128xf32> to vector<1x128xf32>
        %52 = arith.addf %48, %51 : vector<1x128xf32>
        %c1_29 = arith.constant 1 : index
        %c0_30 = arith.constant 0 : index
        %53 = vector.load %arg10[%c1_29, %c0_30] : memref<2x128xf32, #tpu.memory_space<vmem>>, vector<1x128xf32>
        tpu.vector_store %arg10[%c1_29, %c0_30], %52 {strides = array<i32>} : memref<2x128xf32, #tpu.memory_space<vmem>>, vector<1x128xf32>,
      } else {
      }
    } else {
    }
    %c1_i32 = arith.constant 1 : i32
    %3 = arith.cmpi eq, %arg0, %c1_i32 : i32
    %4 = arith.extui %3 : i1 to i32
    %c0_i32_1 = arith.constant 0 : i32
    %5 = arith.cmpi ne, %4, %c0_i32_1 : i32
    scf.if %5 {
      %c0_i32_2 = arith.constant 0 : i32
      %6 = arith.cmpi eq, %arg1, %c0_i32_2 : i32
      %7 = arith.extui %6 : i1 to i32
      %c0_i32_3 = arith.constant 0 : i32
      %8 = arith.cmpi ne, %7, %c0_i32_3 : i32
      scf.if %8 {
        %c0_16 = arith.constant 0 : index
        %c0_17 = arith.constant 0 : index
        %30 = vector.load %arg10[%c0_16, %c0_17] : memref<2x128xf32, #tpu.memory_space<vmem>>, vector<2x128xf32>
        %c0_18 = arith.constant 0 : index
        %c0_19 = arith.constant 0 : index
        %31 = vector.load %arg6[%c0_18, %c0_19] : memref<1x512xf32, #tpu.memory_space<vmem>>, vector<1x128xf32>
        %c0_20 = arith.constant 0 : index
        %c128 = arith.constant 128 : index
        %32 = vector.load %arg6[%c0_20, %c128] : memref<1x512xf32, #tpu.memory_space<vmem>>, vector<1x128xf32>
        %33 = vector.extract_strided_slice %30 {offsets = [0, 0], sizes = [1, 128], strides = [1, 1]} : vector<2x128xf32> to vector<1x128xf32>
        %cst_21 = arith.constant 5.000000e-03 : f32
        %34 = vector.broadcast %cst_21 : f32 to vector<1x128xf32>
        %35 = arith.mulf %33, %34 : vector<1x128xf32>
        %36 = vector.extract_strided_slice %30 {offsets = [1, 0], sizes = [1, 128], strides = [1, 1]} : vector<2x128xf32> to vector<1x128xf32>
        %cst_22 = arith.constant 5.000000e-03 : f32
        %37 = vector.broadcast %cst_22 : f32 to vector<1x128xf32>
        %38 = arith.mulf %36, %37 : vector<1x128xf32>
        %39 = arith.mulf %35, %35 : vector<1x128xf32>
        %40 = arith.subf %38, %39 : vector<1x128xf32>
        %cst_23 = arith.constant 9.99999974E-6 : f32
        %41 = vector.broadcast %cst_23 : f32 to vector<1x128xf32>
        %42 = arith.addf %40, %41 : vector<1x128xf32>
        %43 = math.rsqrt %42 : vector<1x128xf32>
        %44 = arith.mulf %43, %31 : vector<1x128xf32>
        %45 = arith.mulf %35, %44 : vector<1x128xf32>
        %46 = arith.subf %32, %45 : vector<1x128xf32>
        %c0_24 = arith.constant 0 : index
        %c0_25 = arith.constant 0 : index
        %47 = vector.load %arg11[%c0_24, %c0_25] : memref<2x128xf32, #tpu.memory_space<vmem>>, vector<1x128xf32>
        tpu.vector_store %arg11[%c0_24, %c0_25], %44 {strides = array<i32>} : memref<2x128xf32, #tpu.memory_space<vmem>>, vector<1x128xf32>,
        %c1_26 = arith.constant 1 : index
        %c0_27 = arith.constant 0 : index
        %48 = vector.load %arg11[%c1_26, %c0_27] : memref<2x128xf32, #tpu.memory_space<vmem>>, vector<1x128xf32>
        tpu.vector_store %arg11[%c1_26, %c0_27], %46 {strides = array<i32>} : memref<2x128xf32, #tpu.memory_space<vmem>>, vector<1x128xf32>,
      } else {
      }
      %9 = arith.index_cast %arg1 : i32 to index
      %c0 = arith.constant 0 : index
      %c0_4 = arith.constant 0 : index
      %10 = vector.load %arg9[%9, %c0, %c0_4] : memref<2x128x128xf32, #tpu.memory_space<vmem>>, vector<1x128x128xf32>
      %11 = vector.shape_cast %10 : vector<1x128x128xf32> to vector<128x128xf32>
      %c0_5 = arith.constant 0 : index
      %c0_6 = arith.constant 0 : index
      %12 = vector.load %arg11[%c0_5, %c0_6] : memref<2x128xf32, #tpu.memory_space<vmem>>, vector<1x128xf32>
      %c1 = arith.constant 1 : index
      %c0_7 = arith.constant 0 : index
      %13 = vector.load %arg11[%c1, %c0_7] : memref<2x128xf32, #tpu.memory_space<vmem>>, vector<1x128xf32>
      %14 = vector.broadcast %12 : vector<1x128xf32> to vector<128x128xf32>
      %15 = arith.mulf %11, %14 : vector<128x128xf32>
      %16 = vector.broadcast %13 : vector<1x128xf32> to vector<128x128xf32>
      %17 = arith.addf %15, %16 : vector<128x128xf32>
      %cst = arith.constant 0.000000e+00 : f32
      %18 = vector.broadcast %cst : f32 to vector<128x128xf32>
      %19 = arith.cmpf ogt, %17, %18 : vector<128x128xf32>
      %cst_8 = arith.constant 2.000000e-01 : f32
      %20 = vector.broadcast %cst_8 : f32 to vector<128x128xf32>
      %21 = arith.mulf %20, %17 : vector<128x128xf32>
      %22 = arith.select %19, %17, %21 : vector<128x128xi1>, vector<128x128xf32>
      %c0_9 = arith.constant 0 : index
      %c256 = arith.constant 256 : index
      %23 = vector.load %arg6[%c0_9, %c256] : memref<1x512xf32, #tpu.memory_space<vmem>>, vector<1x128xf32>
      %c0_10 = arith.constant 0 : index
      %c384 = arith.constant 384 : index
      %24 = vector.load %arg6[%c0_10, %c384] : memref<1x512xf32, #tpu.memory_space<vmem>>, vector<1x1xf32>
      %cst_11 = arith.constant dense<0.000000e+00> : vector<1x128xf32>
      %25 = tpu.matmul %23, %22, %cst_11 {dimension_numbers = #tpu.dot_dimension_numbers<[1], [1], [0], [0], [0, 0, 1, 0], [], []>} : vector<1x128xf32>, vector<128x128xf32>, vector<1x128xf32> -> vector<1x128xf32>
      %26 = vector.broadcast %24 : vector<1x1xf32> to vector<1x128xf32>
      %27 = arith.addf %25, %26 : vector<1x128xf32>
      %c0_12 = arith.constant 0 : index
      %c0_13 = arith.constant 0 : index
      %28 = vector.load %arg7[%c0_12, %c0_13] : memref<128x128xf32, #tpu.memory_space<vmem>>, vector<128x128xf32>
      tpu.vector_store %arg7[%c0_12, %c0_13], %22 {strides = array<i32>} : memref<128x128xf32, #tpu.memory_space<vmem>>, vector<128x128xf32>,
      %c0_14 = arith.constant 0 : index
      %c0_15 = arith.constant 0 : index
      %29 = vector.load %arg8[%c0_14, %c0_15] : memref<1x128xf32, #tpu.memory_space<vmem>>, vector<1x128xf32>
      tpu.vector_store %arg8[%c0_14, %c0_15], %27 {strides = array<i32>} : memref<1x128xf32, #tpu.memory_space<vmem>>, vector<1x128xf32>,
    } else {
    }
    return
  }
  func.func @transform_0(%arg0: i32, %arg1: i32) -> (i32, i32) {
    %c1_i32 = arith.constant 1 : i32
    %0 = arith.subi %c1_i32, %arg0 : i32
    %1 = arith.muli %0, %arg1 : i32
    %c1_i32_0 = arith.constant 1 : i32
    %2 = arith.muli %arg0, %c1_i32_0 : i32
    %3 = arith.addi %1, %2 : i32
    %c0_i32 = arith.constant 0 : i32
    %c0_i32_1 = arith.constant 0 : i32
    return %3, %c0_i32 : i32, i32
  }
  func.func @transform_1(%arg0: i32, %arg1: i32) -> (i32, i32) {
    %c0_i32 = arith.constant 0 : i32
    %c0_i32_0 = arith.constant 0 : i32
    %c0_i32_1 = arith.constant 0 : i32
    return %c0_i32, %c0_i32_0 : i32, i32
  }
  func.func @transform_2(%arg0: i32, %arg1: i32) -> (i32, i32) {
    %c0_i32 = arith.constant 0 : i32
    %c0_i32_0 = arith.constant 0 : i32
    %c0_i32_1 = arith.constant 0 : i32
    return %c0_i32, %c0_i32_0 : i32, i32
  }
  func.func @transform_3(%arg0: i32, %arg1: i32) -> (i32, i32) {
    %c0_i32 = arith.constant 0 : i32
    %c0_i32_0 = arith.constant 0 : i32
    %c0_i32_1 = arith.constant 0 : i32
    return %c0_i32, %c0_i32_0 : i32, i32
  }
  func.func @transform_4(%arg0: i32, %arg1: i32) -> (i32, i32) {
    %c0_i32 = arith.constant 0 : i32
    %c0_i32_0 = arith.constant 0 : i32
    %c0_i32_1 = arith.constant 0 : i32
    return %c0_i32, %c0_i32_0 : i32, i32
  }
  func.func @transform_5(%arg0: i32, %arg1: i32) -> (i32, i32) {
    %0 = arith.muli %arg1, %arg0 : i32
    %c0_i32 = arith.constant 0 : i32
    %c0_i32_0 = arith.constant 0 : i32
    return %0, %c0_i32 : i32, i32
  }
  func.func @transform_6(%arg0: i32, %arg1: i32) -> (i32, i32) {
    %0 = arith.muli %arg1, %arg0 : i32
    %c0_i32 = arith.constant 0 : i32
    %c0_i32_0 = arith.constant 0 : i32
    return %c0_i32, %0 : i32, i32
  }
}

</mosaic_0001>

<llo_original>
// kernel: discriminator_forward.1
$region0: #{discriminator_forward.1}
  #allocation0 [shape = 'u32[]', space=smem, size = 0x4, offset = 0x4, fixed_abs, tag = 'smem constant byte address 0x4 - core index']
  #allocation1 [shape = 'u32[144,128]{1,0:T(1,128)}', space=vmem, size = 0x12000, scoped, tag = 'internal scratch']
  #allocation2 [shape = 'f32[2,128,128]{2,1,0:T(8,128)}', space=vmem, size = 0x20000, scoped, tag = 'scratch operand']
  #allocation3 [shape = 'f32[2,128]{1,0:T(2,128)}', space=vmem, size = 0x400, scoped, tag = 'scratch operand']
  #allocation4 [shape = 'f32[2,128]{1,0:T(2,128)}', space=vmem, size = 0x400, scoped, tag = 'scratch operand']
  %s0 = inlined_call_operand.vmem [shape: f32[256,128], index: 0, kind: input, shape index: {}]
  %s1 = inlined_call_operand.vmem [shape: f32[128,128], index: 1, kind: input, shape index: {}]
  %s2 = inlined_call_operand.vmem [shape: f32[128,128], index: 2, kind: input, shape index: {}]
  %s3 = inlined_call_operand.vmem [shape: f32[1,256], index: 3, kind: input, shape index: {}]
  %s4 = inlined_call_operand.vmem [shape: f32[1,512], index: 4, kind: input, shape index: {}]
  %s5 = inlined_call_operand.vmem [shape: f32[256,128], index: 5, kind: output, shape index: {0}]
  %s6 = inlined_call_operand.hbm [shape: f32[1,256], index: 6, kind: output, shape index: {1}]
  %7 = xla_tuple %s5, %s6
  %s8 = sld [smem:[#allocation0]]
  $region85: #{discriminator_forward.1} parent=0
    _
  %s10 = ssub.s32 1, %s8
  %s11 = scalar_select 0, %s10, %s8
  $region1: #{discriminator_forward.1} parent=0
    #allocation5 [shape = 'u8[1024]{0}', space=vmem, size = 0x400, scoped, tag = 'output window, operand 1']
    #allocation6 [shape = 's32[2]{0}', space=sflag, size = 0x8, scoped, tag = 'scoped memory for discriminator_forward.1']
    %12 = vsyncpa [#allocation6], 0
    %s13 = scalar_lea.sflag [#allocation6], 1
    %14 = vsyncpa %s13, 0
    loop: start=0, step=1, limit=6
    $region2: #{discriminator_forward.1} parent=1 // loop_pre_header
      _
    $region3: #{discriminator_forward.1} parent=1 // loop_header
      %s16 = sphi 0, %s20
      %p17 = scmp.ge.s32.totalorder %s16, 6
      %s23 = sphi 0, %s35
      %s24 = sphi 0, %s31
      %s25 = sphi 0, %s23
      %s26 = sphi 0, %s24
      %s27 = sphi 0, %s25
      %s28 = sphi 0, %s26
      %s44 = sphi 0, %s46
      %s47 = sphi 0, %s44
      %s48 = sphi 0, %s47
      %s64 = sphi 0, %s48
      %s68 = sphi 0, %s68
      %s70 = sphi 0, %s68
      %s71 = sphi 0, %s70
      %s85 = sphi 0, %s71
      %s89 = sphi 0, %s89
      %s91 = sphi 0, %s89
      %s92 = sphi 0, %s91
      %s106 = sphi 0, %s92
      %s110 = sphi 0, %s110
      %s112 = sphi 0, %s110
      %s113 = sphi 0, %s112
      %s127 = sphi 0, %s113
      %s131 = sphi 0, %s131
      %s133 = sphi 0, %s131
      %s134 = sphi 0, %s133
      %s148 = sphi 0, %s134
      %s156 = sphi 0, %s158
      %s159 = sphi 0, %s156
      %s160 = sphi 0, %s159
      %s176 = sphi 0, %s160
      %s184 = sphi 0, %s186
      %s187 = sphi 0, %s184
      %s188 = sphi 0, %s187
      %s204 = sphi 0, %s188
    $region4: #{discriminator_forward.1} parent=1 // loop_header_branch
      %19 = sbr.rel (%p17) target = $region8
    $region5: #{discriminator_forward.1} parent=1 // loop_body
      %s21 = ssub.s32 %s16, 1
      %s22 = ssub.s32 %s16, 2
      %s29 = sadd.s32 1, %s24
      %p30 = scmp.ge.s32.totalorder %s29, 2
      %s31 = scalar_select %p30, 0, %s29
      %s32 = sadd.s32 1, %s23
      %s33 = scalar_select %p30, %s32, %s23
      %p34 = scmp.ge.s32.totalorder %s33, 2
      %s35 = scalar_select %p34, 0, %s33
      %s36 = ssub.s32 1, %s23
      %s37 = smul.u32 %s36, %s24
      %s38 = sadd.s32 %s37, %s23
      %s39 = ssub.s32 1, %s35
      %s40 = smul.u32 %s39, %s31
      %s41 = sadd.s32 %s40, %s35
      %s42 = ssub.s32 %s38, %s41
      %p43 = scmp.eq.s32.totalorder %s42, 0
      %s45 = sadd.s32 %s44, 1
      %s46 = scalar_select %p43, %s44, %s45
      %p49 = pneg %p43
      %p50 = scmp.eq.s32.totalorder %s16, 3
      %p51 = por %p49, %p50
      %p52 = scmp.ne.s32.totalorder %s44, %s47
      %p53 = scmp.eq.s32.totalorder %s16, 0
      %p54 = por %p52, %p53
      %p55 = scmp.ne.s32.totalorder %s44, %s47
      %p56 = scmp.eq.s32.totalorder %s21, 3
      %p57 = por %p55, %p56
      %p58 = scmp.ne.s32.totalorder %s47, %s48
      %p59 = scmp.eq.s32.totalorder %s21, 0
      %p60 = por %p58, %p59
      %p61 = scmp.ne.s32.totalorder %s47, %s48
      %p62 = scmp.eq.s32.totalorder %s22, 3
      %p63 = por %p61, %p62
      %p65 = scmp.ne.s32.totalorder %s48, %s64
      %p66 = scmp.eq.s32.totalorder %s22, 0
      %p67 = por %p65, %p66
      %s69 = sadd.s32 %s68, 1
      %p72 = scmp.eq.s32.totalorder %s16, 3
      %p73 = scmp.ne.s32.totalorder %s68, %s70
      %p74 = scmp.eq.s32.totalorder %s16, 0
      %p75 = por %p73, %p74
      %p76 = scmp.ne.s32.totalorder %s68, %s70
      %p77 = scmp.eq.s32.totalorder %s21, 3
      %p78 = por %p76, %p77
      %p79 = scmp.ne.s32.totalorder %s70, %s71
      %p80 = scmp.eq.s32.totalorder %s21, 0
      %p81 = por %p79, %p80
      %p82 = scmp.ne.s32.totalorder %s70, %s71
      %p83 = scmp.eq.s32.totalorder %s22, 3
      %p84 = por %p82, %p83
      %p86 = scmp.ne.s32.totalorder %s71, %s85
      %p87 = scmp.eq.s32.totalorder %s22, 0
      %p88 = por %p86, %p87
      %s90 = sadd.s32 %s89, 1
      %p93 = scmp.eq.s32.totalorder %s16, 3
      %p94 = scmp.ne.s32.totalorder %s89, %s91
      %p95 = scmp.eq.s32.totalorder %s16, 0
      %p96 = por %p94, %p95
      %p97 = scmp.ne.s32.totalorder %s89, %s91
      %p98 = scmp.eq.s32.totalorder %s21, 3
      %p99 = por %p97, %p98
      %p100 = scmp.ne.s32.totalorder %s91, %s92
      %p101 = scmp.eq.s32.totalorder %s21, 0
      %p102 = por %p100, %p101
      %p103 = scmp.ne.s32.totalorder %s91, %s92
      %p104 = scmp.eq.s32.totalorder %s22, 3
      %p105 = por %p103, %p104
      %p107 = scmp.ne.s32.totalorder %s92, %s106
      %p108 = scmp.eq.s32.totalorder %s22, 0
      %p109 = por %p107, %p108
      %s111 = sadd.s32 %s110, 1
      %p114 = scmp.eq.s32.totalorder %s16, 3
      %p115 = scmp.ne.s32.totalorder %s110, %s112
      %p116 = scmp.eq.s32.totalorder %s16, 0
      %p117 = por %p115, %p116
      %p118 = scmp.ne.s32.totalorder %s110, %s112
      %p119 = scmp.eq.s32.totalorder %s21, 3
      %p120 = por %p118, %p119
      %p121 = scmp.ne.s32.totalorder %s112, %s113
      %p122 = scmp.eq.s32.totalorder %s21, 0
      %p123 = por %p121, %p122
      %p124 = scmp.ne.s32.totalorder %s112, %s113
      %p125 = scmp.eq.s32.totalorder %s22, 3
      %p126 = por %p124, %p125
      %p128 = scmp.ne.s32.totalorder %s113, %s127
      %p129 = scmp.eq.s32.totalorder %s22, 0
      %p130 = por %p128, %p129
      %s132 = sadd.s32 %s131, 1
      %p135 = scmp.eq.s32.totalorder %s16, 3
      %p136 = scmp.ne.s32.totalorder %s131, %s133
      %p137 = scmp.eq.s32.totalorder %s16, 0
      %p138 = por %p136, %p137
      %p139 = scmp.ne.s32.totalorder %s131, %s133
      %p140 = scmp.eq.s32.totalorder %s21, 3
      %p141 = por %p139, %p140
      %p142 = scmp.ne.s32.totalorder %s133, %s134
      %p143 = scmp.eq.s32.totalorder %s21, 0
      %p144 = por %p142, %p143
      %p145 = scmp.ne.s32.totalorder %s133, %s134
      %p146 = scmp.eq.s32.totalorder %s22, 3
      %p147 = por %p145, %p146
      %p149 = scmp.ne.s32.totalorder %s134, %s148
      %p150 = scmp.eq.s32.totalorder %s22, 0
      %p151 = por %p149, %p150
      %s152 = smul.u32 %s24, %s23
      %s153 = smul.u32 %s31, %s35
      %s154 = ssub.s32 %s152, %s153
      %p155 = scmp.eq.s32.totalorder %s154, 0
      %s157 = sadd.s32 %s156, 1
      %s158 = scalar_select %p155, %s156, %s157
      %p161 = pneg %p155
      %p162 = scmp.eq.s32.totalorder %s16, 3
      %p163 = por %p161, %p162
      %p164 = scmp.ne.s32.totalorder %s156, %s159
      %p165 = scmp.eq.s32.totalorder %s16, 0
      %p166 = por %p164, %p165
      %p167 = scmp.ne.s32.totalorder %s156, %s159
      %p168 = scmp.eq.s32.totalorder %s21, 3
      %p169 = por %p167, %p168
      %p170 = scmp.ne.s32.totalorder %s159, %s160
      %p171 = scmp.eq.s32.totalorder %s21, 0
      %p172 = por %p170, %p171
      %p173 = scmp.ne.s32.totalorder %s159, %s160
      %p174 = scmp.eq.s32.totalorder %s22, 3
      %p175 = por %p173, %p174
      %p177 = scmp.ne.s32.totalorder %s160, %s176
      %p178 = scmp.eq.s32.totalorder %s22, 0
      %p179 = por %p177, %p178
      %s180 = smul.u32 %s24, %s23
      %s181 = smul.u32 %s31, %s35
      %s182 = ssub.s32 %s180, %s181
      %p183 = scmp.eq.s32.totalorder %s182, 0
      %s185 = sadd.s32 %s184, 1
      %s186 = scalar_select %p183, %s184, %s185
      %p189 = pneg %p183
      %p190 = scmp.eq.s32.totalorder %s16, 3
      %p191 = por %p189, %p190
      %p192 = scmp.ne.s32.totalorder %s184, %s187
      %p193 = scmp.eq.s32.totalorder %s16, 0
      %p194 = por %p192, %p193
      %p195 = scmp.ne.s32.totalorder %s184, %s187
      %p196 = scmp.eq.s32.totalorder %s21, 3
      %p197 = por %p195, %p196
      %p198 = scmp.ne.s32.totalorder %s187, %s188
      %p199 = scmp.eq.s32.totalorder %s21, 0
      %p200 = por %p198, %p199
      %p201 = scmp.ne.s32.totalorder %s187, %s188
      %p202 = scmp.eq.s32.totalorder %s22, 3
      %p203 = por %p201, %p202
      %p205 = scmp.ne.s32.totalorder %s188, %s204
      %p206 = scmp.eq.s32.totalorder %s22, 0
      %p207 = por %p205, %p206
      %p208 = scmp.le.s32.totalorder 1, %s16
      %p209 = scmp.lt.s32.totalorder %s16, 5
      %p210 = pnand %p208, %p209
      %p211 = pneg %p210
      // Predicated region
      $region9: #{discriminator_forward.1} parent=5 // pred_check
        _
      $region10: #{discriminator_forward.1} parent=5 // pred_check_branch
        %213 = sbr.rel (%p210) target = $region12
      $region11: #{discriminator_forward.1} parent=5 // pred_region
        %s214 = ssub.s32 %s16, 1
        // Predicated region
        $region13: #{discriminator_forward.1} parent=11 // pred_check
          %p215 = pneg %p81
        $region14: #{discriminator_forward.1} parent=11 // pred_check_branch
          %217 = sbr.rel (%p215) target = $region16
        $region15: #{discriminator_forward.1} parent=11 // pred_region
          _
        $region16: #{discriminator_forward.1} parent=11 // pred_fallthru
          _
        // Predicated region
        $region17: #{discriminator_forward.1} parent=11 // pred_check
          %p218 = pneg %p102
        $region18: #{discriminator_forward.1} parent=11 // pred_check_branch
          %220 = sbr.rel (%p218) target = $region20
        $region19: #{discriminator_forward.1} parent=11 // pred_region
          _
        $region20: #{discriminator_forward.1} parent=11 // pred_fallthru
          _
        // Predicated region
        $region21: #{discriminator_forward.1} parent=11 // pred_check
          %p221 = pneg %p123
        $region22: #{discriminator_forward.1} parent=11 // pred_check_branch
          %223 = sbr.rel (%p221) target = $region24
        $region23: #{discriminator_forward.1} parent=11 // pred_region
          _
        $region24: #{discriminator_forward.1} parent=11 // pred_fallthru
          _
        // Predicated region
        $region25: #{discriminator_forward.1} parent=11 // pred_check
          %p224 = pneg %p144
        $region26: #{discriminator_forward.1} parent=11 // pred_check_branch
          %226 = sbr.rel (%p224) target = $region28
        $region27: #{discriminator_forward.1} parent=11 // pred_region
          _
        $region28: #{discriminator_forward.1} parent=11 // pred_fallthru
          _
      $region12: #{discriminator_forward.1} parent=5 // pred_fallthru
        _
      %p227 = scmp.lt.s32.totalorder %s16, 4
      // Predicated region
      $region29: #{discriminator_forward.1} parent=5 // pred_check
        %p228 = pneg %p227
      $region30: #{discriminator_forward.1} parent=5 // pred_check_branch
        %230 = sbr.rel (%p228) target = $region32
      $region31: #{discriminator_forward.1} parent=5 // pred_region
        // Predicated region
        $region33: #{discriminator_forward.1} parent=31 // pred_check
          %p231 = pneg %p54
        $region34: #{discriminator_forward.1} parent=31 // pred_check_branch
          %233 = sbr.rel (%p231) target = $region36
        $region35: #{discriminator_forward.1} parent=31 // pred_region
          %s234 = ssub.s32 1, %s23
          %s235 = smul.u32 %s234, %s24
          %s236 = sadd.s32 %s235, %s23
          %s237 = smul.u32 16, %s236
          %p238 = scmp.lt.s32.totalorder %s237, 31
          %s239 = scalar_select %p238, %s237, 31
          %s240 = smul.addr %s239, 8
          %s241 = scalar_lea.vmem %s0, %s240
          %s242 = ssub.s32 1, %s23
          %s243 = smul.u32 %s242, %s24
          %s244 = sadd.s32 %s243, %s23
          %s245 = smul.u32 16, %s244
        $region36: #{discriminator_forward.1} parent=31 // pred_fallthru
          _
      $region32: #{discriminator_forward.1} parent=5 // pred_fallthru
        _
      %p246 = scmp.le.s32.totalorder 1, %s16
      %p247 = scmp.lt.s32.totalorder %s16, 5
      %p248 = pnand %p246, %p247
      %p249 = pneg %p248
      // Predicated region
      $region37: #{discriminator_forward.1} parent=5 // pred_check
        _
      $region38: #{discriminator_forward.1} parent=5 // pred_check_branch
        %251 = sbr.rel (%p248) target = $region40
      $region39: #{discriminator_forward.1} parent=5 // pred_region
        %s252 = ssub.s32 %s16, 1
        %s253 = ssub.s32 1, %s25
        %s254 = smul.u32 %s253, %s26
        %s255 = sadd.s32 %s254, %s25
        %s256 = smul.u32 16, %s255
        %p257 = scmp.lt.s32.totalorder %s256, 31
        %s258 = scalar_select %p257, %s256, 31
        %s259 = smul.addr %s258, 8
        %s260 = scalar_lea.vmem %s0, %s259
        %p261 = pneg %p60
        %p262 = pneg %p57
        %p263 = pneg %p81
        %p264 = pneg %p78
        %p265 = pneg %p102
        %p266 = pneg %p99
        %p267 = pneg %p123
        %p268 = pneg %p120
        %p269 = pneg %p144
        %p270 = pneg %p141
        %p271 = pneg %p172
        %p272 = pneg %p169
        %s273 = smul.u32 %s26, %s25
        %s274 = smul.u32 16, %s273
        %p275 = scmp.lt.s32.totalorder %s274, 31
        %s276 = scalar_select %p275, %s274, 31
        %s277 = smul.addr %s276, 8
        %s278 = scalar_lea.vmem %s5, %s277
        %p279 = pneg %p200
        %p280 = pneg %p197
        %s281 = sand.u32 %s187, 1
        %s282 = scalar_lea.sflag [#allocation6], %s281
        %s283 = sand.u32 %s187, 1
        %s284 = scalar_lea.vmem [#allocation5], %s283
        %s285 = ssub.s32 1, %s25
        %s286 = smul.u32 %s285, %s26
        %s287 = sadd.s32 %s286, %s25
        %s288 = smul.u32 16, %s287
        %p289 = scmp.lt.s32.totalorder %s288, 31
        %s290 = scalar_select %p289, %s288, 31
        %s291 = smul.addr %s290, 8
        %s292 = scalar_lea.vmem %s0, %s291
        %s293 = ssub.s32 1, %s25
        %s294 = smul.u32 %s293, %s26
        %s295 = sadd.s32 %s294, %s25
        %s296 = smul.u32 16, %s295
        %s297 = smul.u32 %s26, %s25
        %s298 = smul.u32 16, %s297
        %p299 = scmp.lt.s32.totalorder %s298, 31
        %s300 = scalar_select %p299, %s298, 31
        %s301 = smul.addr %s300, 8
        %s302 = scalar_lea.vmem %s5, %s301
        %s303 = smul.u32 %s26, %s25
        %s304 = smul.u32 16, %s303
        %s305 = smul.u32 %s26, %s25
        %p306 = scmp.eq.s32.totalorder %s25, 0
        // Predicated region
        $region41: #{discriminator_forward.1} parent=39 // pred_check
          %p307 = pneg %p306
        $region42: #{discriminator_forward.1} parent=39 // pred_check_branch
          %309 = sbr.rel (%p307) target = $region44
        $region43: #{discriminator_forward.1} parent=39 // pred_region
          %p310 = scmp.eq.s32.totalorder %s26, 0
          // Predicated region
          $region45: #{discriminator_forward.1} parent=43 // pred_check
            %p311 = pneg %p310
          $region46: #{discriminator_forward.1} parent=43 // pred_check_branch
            %313 = sbr.rel (%p311) target = $region48
          $region47: #{discriminator_forward.1} parent=43 // pred_region
            %314 = vst [vmem:[#allocation3] sm:$0x3] 0.0
          $region48: #{discriminator_forward.1} parent=43 // pred_fallthru
            _
          %v315 = vld [vmem:[%s292] sm:$0xff]
          %v316 = vld [vmem:[%s292 + $0x8] sm:$0xff]
          %v317 = vld [vmem:[%s292 + $0x10] sm:$0xff]
          %v318 = vld [vmem:[%s292 + $0x18] sm:$0xff]
          %v319 = vld [vmem:[%s292 + $0x20] sm:$0xff]
          %v320 = vld [vmem:[%s292 + $0x28] sm:$0xff]
          %v321 = vld [vmem:[%s292 + $0x30] sm:$0xff]
          %v322 = vld [vmem:[%s292 + $0x38] sm:$0xff]
          %v323 = vld [vmem:[%s292 + $0x40] sm:$0xff]
          %v324 = vld [vmem:[%s292 + $0x48] sm:$0xff]
          %v325 = vld [vmem:[%s292 + $0x50] sm:$0xff]
          %v326 = vld [vmem:[%s292 + $0x58] sm:$0xff]
          %v327 = vld [vmem:[%s292 + $0x60] sm:$0xff]
          %v328 = vld [vmem:[%s292 + $0x68] sm:$0xff]
          %v329 = vld [vmem:[%s292 + $0x70] sm:$0xff]
          %v330 = vld [vmem:[%s292 + $0x78] sm:$0xff]
          %v331 = vld [vmem:[%s3] sm:$0x1]
          %v332 = vld [vmem:[%s3 + $0x1] sm:$0x1]
          %v333 = vld [vmem:[%s1] sm:$0xff]
          %v334 = vld [vmem:[%s1 + $0x8] sm:$0xff]
          %v335 = vld [vmem:[%s1 + $0x10] sm:$0xff]
          %v336 = vld [vmem:[%s1 + $0x18] sm:$0xff]
          %v337 = vld [vmem:[%s1 + $0x20] sm:$0xff]
          %v338 = vld [vmem:[%s1 + $0x28] sm:$0xff]
          %v339 = vld [vmem:[%s1 + $0x30] sm:$0xff]
          %v340 = vld [vmem:[%s1 + $0x38] sm:$0xff]
          %v341 = vld [vmem:[%s1 + $0x40] sm:$0xff]
          %v342 = vld [vmem:[%s1 + $0x48] sm:$0xff]
          %v343 = vld [vmem:[%s1 + $0x50] sm:$0xff]
          %v344 = vld [vmem:[%s1 + $0x58] sm:$0xff]
          %v345 = vld [vmem:[%s1 + $0x60] sm:$0xff]
          %v346 = vld [vmem:[%s1 + $0x68] sm:$0xff]
          %v347 = vld [vmem:[%s1 + $0x70] sm:$0xff]
          %v348 = vld [vmem:[%s1 + $0x78] sm:$0xff]
          %v350 = vlaneseq
          %v351 = vshrl.u32 %v350, 7
          %v352 = vsub.s32 0, %v351
          %v353 = vrot.slane %v331, %v352
          %355 = vmatprep.subr.mxu0 0.0
          %356 = vmatpush1.msra.mxu0 %v333
          %357 = vmatprep.subr.mxu0 0.0
          %358 = vmatpush1.msra.mxu0 %v334
          %359 = vmatprep.subr.mxu0 0.0
          %360 = vmatpush1.msra.mxu0 %v335
          %361 = vmatprep.subr.mxu0 0.0
          %362 = vmatpush1.msra.mxu0 %v336
          %363 = vmatprep.subr.mxu0 0.0
          %364 = vmatpush1.msra.mxu0 %v337
          %365 = vmatprep.subr.mxu0 0.0
          %366 = vmatpush1.msra.mxu0 %v338
          %367 = vmatprep.subr.mxu0 0.0
          %368 = vmatpush1.msra.mxu0 %v339
          %369 = vmatprep.subr.mxu0 0.0
          %370 = vmatpush1.msra.mxu0 %v340
          %371 = vmatprep.subr.mxu0 0.0
          %372 = vmatpush1.msra.mxu0 %v341
          %373 = vmatprep.subr.mxu0 0.0
          %374 = vmatpush1.msra.mxu0 %v342
          %375 = vmatprep.subr.mxu0 0.0
          %376 = vmatpush1.msra.mxu0 %v343
          %377 = vmatprep.subr.mxu0 0.0
          %378 = vmatpush1.msra.mxu0 %v344
          %379 = vmatprep.subr.mxu0 0.0
          %380 = vmatpush1.msra.mxu0 %v345
          %381 = vmatprep.subr.mxu0 0.0
          %382 = vmatpush1.msra.mxu0 %v346
          %383 = vmatprep.subr.mxu0 0.0
          %384 = vmatpush1.msra.mxu0 %v347
          %385 = vmatprep.subr.mxu0 0.0
          %386 = vmatpush1.msra.mxu0 %v348
          %387 = vmatprep.subr.mxu0 0.0
          %388 = vmatpush1.msra.mxu0 0.0
          %389 = vmatprep.subr.mxu0 0.0
          %390 = vmatpush1.msra.mxu0 0.0
          %391 = vmatprep.subr.mxu0 0.0
          %392 = vmatpush1.msra.mxu0 0.0
          %393 = vmatprep.subr.mxu0 0.0
          %394 = vmatpush1.msra.mxu0 0.0
          %395 = vmatprep.subr.mxu0 0.0
          %396 = vmatpush1.msra.mxu0 0.0
          %397 = vmatprep.subr.mxu0 0.0
          %398 = vmatpush1.msra.mxu0 0.0
          %399 = vmatprep.subr.mxu0 0.0
          %400 = vmatpush1.msra.mxu0 0.0
          %401 = vmatprep.subr.mxu0 0.0
          %402 = vmatpush1.msra.mxu0 0.0
          %403 = vmatprep.subr.mxu0 0.0
          %404 = vmatpush1.msra.mxu0 0.0
          %405 = vmatprep.subr.mxu0 0.0
          %406 = vmatpush1.msra.mxu0 0.0
          %407 = vmatprep.subr.mxu0 0.0
          %408 = vmatpush1.msra.mxu0 0.0
          %409 = vmatprep.subr.mxu0 0.0
          %410 = vmatpush1.msra.mxu0 0.0
          %411 = vmatprep.subr.mxu0 0.0
          %412 = vmatpush1.msra.mxu0 0.0
          %413 = vmatprep.subr.mxu0 0.0
          %414 = vmatpush1.msra.mxu0 0.0
          %415 = vmatprep.subr.mxu0 0.0
          %416 = vmatpush1.msra.mxu0 0.0
          %417 = vmatprep.subr.mxu0 0.0
          %418 = vmatpush1.msra.mxu0 0.0
          %419 = vmatprep.mubr.f32.mxu0 0.0
          %420 = vmatmul.mubr.f32.gmra.mrb[0].mxu0 %v315
          %v421 = vpop.f32.mrb[0].mxu0
          %v422 = vadd.f32 %v353, %v421
          %v423 = vpop.f32.mrb[0].mxu0
          %424 = vmatprep.mubr.f32.mxu0 0.0
          %425 = vmatmul.mubr.f32.gmra.mrb[0].mxu0 %v316
          %v426 = vpop.f32.mrb[0].mxu0
          %v427 = vadd.f32 %v353, %v426
          %v428 = vpop.f32.mrb[0].mxu0
          %429 = vmatprep.mubr.f32.mxu0 0.0
          %430 = vmatmul.mubr.f32.gmra.mrb[0].mxu0 %v317
          %v431 = vpop.f32.mrb[0].mxu0
          %v432 = vadd.f32 %v353, %v431
          %v433 = vpop.f32.mrb[0].mxu0
          %434 = vmatprep.mubr.f32.mxu0 0.0
          %435 = vmatmul.mubr.f32.gmra.mrb[0].mxu0 %v318
          %v436 = vpop.f32.mrb[0].mxu0
          %v437 = vadd.f32 %v353, %v436
          %v438 = vpop.f32.mrb[0].mxu0
          %439 = vmatprep.mubr.f32.mxu0 0.0
          %440 = vmatmul.mubr.f32.gmra.mrb[0].mxu0 %v319
          %v441 = vpop.f32.mrb[0].mxu0
          %v442 = vadd.f32 %v353, %v441
          %v443 = vpop.f32.mrb[0].mxu0
          %444 = vmatprep.mubr.f32.mxu0 0.0
          %445 = vmatmul.mubr.f32.gmra.mrb[0].mxu0 %v320
          %v446 = vpop.f32.mrb[0].mxu0
          %v447 = vadd.f32 %v353, %v446
          %v448 = vpop.f32.mrb[0].mxu0
          %449 = vmatprep.mubr.f32.mxu0 0.0
          %450 = vmatmul.mubr.f32.gmra.mrb[0].mxu0 %v321
          %v451 = vpop.f32.mrb[0].mxu0
          %v452 = vadd.f32 %v353, %v451
          %v453 = vpop.f32.mrb[0].mxu0
          %454 = vmatprep.mubr.f32.mxu0 0.0
          %455 = vmatmul.mubr.f32.gmra.mrb[0].mxu0 %v322
          %v456 = vpop.f32.mrb[0].mxu0
          %v457 = vadd.f32 %v353, %v456
          %v458 = vpop.f32.mrb[0].mxu0
          %459 = vmatprep.mubr.f32.mxu0 0.0
          %460 = vmatmul.mubr.f32.gmra.mrb[0].mxu0 %v323
          %v461 = vpop.f32.mrb[0].mxu0
          %v462 = vadd.f32 %v353, %v461
          %v463 = vpop.f32.mrb[0].mxu0
          %464 = vmatprep.mubr.f32.mxu0 0.0
          %465 = vmatmul.mubr.f32.gmra.mrb[0].mxu0 %v324
          %v466 = vpop.f32.mrb[0].mxu0
          %v467 = vadd.f32 %v353, %v466
          %v468 = vpop.f32.mrb[0].mxu0
          %469 = vmatprep.mubr.f32.mxu0 0.0
          %470 = vmatmul.mubr.f32.gmra.mrb[0].mxu0 %v325
          %v471 = vpop.f32.mrb[0].mxu0
          %v472 = vadd.f32 %v353, %v471
          %v473 = vpop.f32.mrb[0].mxu0
          %474 = vmatprep.mubr.f32.mxu0 0.0
          %475 = vmatmul.mubr.f32.gmra.mrb[0].mxu0 %v326
          %v476 = vpop.f32.mrb[0].mxu0
          %v477 = vadd.f32 %v353, %v476
          %v478 = vpop.f32.mrb[0].mxu0
          %479 = vmatprep.mubr.f32.mxu0 0.0
          %480 = vmatmul.mubr.f32.gmra.mrb[0].mxu0 %v327
          %v481 = vpop.f32.mrb[0].mxu0
          %v482 = vadd.f32 %v353, %v481
          %v483 = vpop.f32.mrb[0].mxu0
          %484 = vmatprep.mubr.f32.mxu0 0.0
          %485 = vmatmul.mubr.f32.gmra.mrb[0].mxu0 %v328
          %v486 = vpop.f32.mrb[0].mxu0
          %v487 = vadd.f32 %v353, %v486
          %v488 = vpop.f32.mrb[0].mxu0
          %489 = vmatprep.mubr.f32.mxu0 0.0
          %490 = vmatmul.mubr.f32.gmra.mrb[0].mxu0 %v329
          %v491 = vpop.f32.mrb[0].mxu0
          %v492 = vadd.f32 %v353, %v491
          %v493 = vpop.f32.mrb[0].mxu0
          %494 = vmatprep.mubr.f32.mxu0 0.0
          %495 = vmatmul.mubr.f32.gmra.mrb[0].mxu0 %v330
          %v496 = vpop.f32.mrb[0].mxu0
          %v497 = vadd.f32 %v353, %v496
          %v498 = vpop.f32.mrb[0].mxu0
          %499 = vdwg.mxu0
          %vm500 = vcmp.gt.f32.partialorder %v422, 0.0
          %vm501 = vcmp.gt.f32.partialorder %v427, 0.0
          %vm502 = vcmp.gt.f32.partialorder %v432, 0.0
          %vm503 = vcmp.gt.f32.partialorder %v437, 0.0
          %vm504 = vcmp.gt.f32.partialorder %v442, 0.0
          %vm505 = vcmp.gt.f32.partialorder %v447, 0.0
          %vm506 = vcmp.gt.f32.partialorder %v452, 0.0
          %vm507 = vcmp.gt.f32.partialorder %v457, 0.0
          %vm508 = vcmp.gt.f32.partialorder %v462, 0.0
          %vm509 = vcmp.gt.f32.partialorder %v467, 0.0
          %vm510 = vcmp.gt.f32.partialorder %v472, 0.0
          %vm511 = vcmp.gt.f32.partialorder %v477, 0.0
          %vm512 = vcmp.gt.f32.partialorder %v482, 0.0
          %vm513 = vcmp.gt.f32.partialorder %v487, 0.0
          %vm514 = vcmp.gt.f32.partialorder %v492, 0.0
          %vm515 = vcmp.gt.f32.partialorder %v497, 0.0
          %v516 = vmul.f32 %v422, 0.2
          %v517 = vmul.f32 %v427, 0.2
          %v518 = vmul.f32 %v432, 0.2
          %v519 = vmul.f32 %v437, 0.2
          %v520 = vmul.f32 %v442, 0.2
          %v521 = vmul.f32 %v447, 0.2
          %v522 = vmul.f32 %v452, 0.2
          %v523 = vmul.f32 %v457, 0.2
          %v524 = vmul.f32 %v462, 0.2
          %v525 = vmul.f32 %v467, 0.2
          %v526 = vmul.f32 %v472, 0.2
          %v527 = vmul.f32 %v477, 0.2
          %v528 = vmul.f32 %v482, 0.2
          %v529 = vmul.f32 %v487, 0.2
          %v530 = vmul.f32 %v492, 0.2
          %v531 = vmul.f32 %v497, 0.2
          %v532 = vsel %vm500, %v422, %v516
          %v533 = vsel %vm501, %v427, %v517
          %v534 = vsel %vm502, %v432, %v518
          %v535 = vsel %vm503, %v437, %v519
          %v536 = vsel %vm504, %v442, %v520
          %v537 = vsel %vm505, %v447, %v521
          %v538 = vsel %vm506, %v452, %v522
          %v539 = vsel %vm507, %v457, %v523
          %v540 = vsel %vm508, %v462, %v524
          %v541 = vsel %vm509, %v467, %v525
          %v542 = vsel %vm510, %v472, %v526
          %v543 = vsel %vm511, %v477, %v527
          %v544 = vsel %vm512, %v482, %v528
          %v545 = vsel %vm513, %v487, %v529
          %v546 = vsel %vm514, %v492, %v530
          %v547 = vsel %vm515, %v497, %v531
          %v548 = vld [vmem:[%s2] sm:$0xff]
          %v549 = vld [vmem:[%s2 + $0x8] sm:$0xff]
          %v550 = vld [vmem:[%s2 + $0x10] sm:$0xff]
          %v551 = vld [vmem:[%s2 + $0x18] sm:$0xff]
          %v552 = vld [vmem:[%s2 + $0x20] sm:$0xff]
          %v553 = vld [vmem:[%s2 + $0x28] sm:$0xff]
          %v554 = vld [vmem:[%s2 + $0x30] sm:$0xff]
          %v555 = vld [vmem:[%s2 + $0x38] sm:$0xff]
          %v556 = vld [vmem:[%s2 + $0x40] sm:$0xff]
          %v557 = vld [vmem:[%s2 + $0x48] sm:$0xff]
          %v558 = vld [vmem:[%s2 + $0x50] sm:$0xff]
          %v559 = vld [vmem:[%s2 + $0x58] sm:$0xff]
          %v560 = vld [vmem:[%s2 + $0x60] sm:$0xff]
          %v561 = vld [vmem:[%s2 + $0x68] sm:$0xff]
          %v562 = vld [vmem:[%s2 + $0x70] sm:$0xff]
          %v563 = vld [vmem:[%s2 + $0x78] sm:$0xff]
          %v565 = vlaneseq
          %v566 = vshrl.u32 %v565, 7
          %v567 = vsub.s32 0, %v566
          %v568 = vrot.slane %v332, %v567
          %570 = vmatprep.subr.mxu0 0.0
          %571 = vmatpush1.msra.mxu0 %v548
          %572 = vmatprep.subr.mxu0 0.0
          %573 = vmatpush1.msra.mxu0 %v549
          %574 = vmatprep.subr.mxu0 0.0
          %575 = vmatpush1.msra.mxu0 %v550
          %576 = vmatprep.subr.mxu0 0.0
          %577 = vmatpush1.msra.mxu0 %v551
          %578 = vmatprep.subr.mxu0 0.0
          %579 = vmatpush1.msra.mxu0 %v552
          %580 = vmatprep.subr.mxu0 0.0
          %581 = vmatpush1.msra.mxu0 %v553
          %582 = vmatprep.subr.mxu0 0.0
          %583 = vmatpush1.msra.mxu0 %v554
          %584 = vmatprep.subr.mxu0 0.0
          %585 = vmatpush1.msra.mxu0 %v555
          %586 = vmatprep.subr.mxu0 0.0
          %587 = vmatpush1.msra.mxu0 %v556
          %588 = vmatprep.subr.mxu0 0.0
          %589 = vmatpush1.msra.mxu0 %v557
          %590 = vmatprep.subr.mxu0 0.0
          %591 = vmatpush1.msra.mxu0 %v558
          %592 = vmatprep.subr.mxu0 0.0
          %593 = vmatpush1.msra.mxu0 %v559
          %594 = vmatprep.subr.mxu0 0.0
          %595 = vmatpush1.msra.mxu0 %v560
          %596 = vmatprep.subr.mxu0 0.0
          %597 = vmatpush1.msra.mxu0 %v561
          %598 = vmatprep.subr.mxu0 0.0
          %599 = vmatpush1.msra.mxu0 %v562
          %600 = vmatprep.subr.mxu0 0.0
          %601 = vmatpush1.msra.mxu0 %v563
          %602 = vmatprep.subr.mxu0 0.0
          %603 = vmatpush1.msra.mxu0 0.0
          %604 = vmatprep.subr.mxu0 0.0
          %605 = vmatpush1.msra.mxu0 0.0
          %606 = vmatprep.subr.mxu0 0.0
          %607 = vmatpush1.msra.mxu0 0.0
          %608 = vmatprep.subr.mxu0 0.0
          %609 = vmatpush1.msra.mxu0 0.0
          %610 = vmatprep.subr.mxu0 0.0
          %611 = vmatpush1.msra.mxu0 0.0
          %612 = vmatprep.subr.mxu0 0.0
          %613 = vmatpush1.msra.mxu0 0.0
          %614 = vmatprep.subr.mxu0 0.0
          %615 = vmatpush1.msra.mxu0 0.0
          %616 = vmatprep.subr.mxu0 0.0
          %617 = vmatpush1.msra.mxu0 0.0
          %618 = vmatprep.subr.mxu0 0.0
          %619 = vmatpush1.msra.mxu0 0.0
          %620 = vmatprep.subr.mxu0 0.0
          %621 = vmatpush1.msra.mxu0 0.0
          %622 = vmatprep.subr.mxu0 0.0
          %623 = vmatpush1.msra.mxu0 0.0
          %624 = vmatprep.subr.mxu0 0.0
          %625 = vmatpush1.msra.mxu0 0.0
          %626 = vmatprep.subr.mxu0 0.0
          %627 = vmatpush1.msra.mxu0 0.0
          %628 = vmatprep.subr.mxu0 0.0
          %629 = vmatpush1.msra.mxu0 0.0
          %630 = vmatprep.subr.mxu0 0.0
          %631 = vmatpush1.msra.mxu0 0.0
          %632 = vmatprep.subr.mxu0 0.0
          %633 = vmatpush1.msra.mxu0 0.0
          %634 = vmatprep.mubr.f32.mxu0 0.0
          %635 = vmatmul.mubr.f32.gmra.mrb[0].mxu0 %v532
          %v636 = vpop.f32.mrb[0].mxu0
          %v637 = vadd.f32 %v568, %v636
          %v638 = vpop.f32.mrb[0].mxu0
          %639 = vmatprep.mubr.f32.mxu0 0.0
          %640 = vmatmul.mubr.f32.gmra.mrb[0].mxu0 %v533
          %v641 = vpop.f32.mrb[0].mxu0
          %v642 = vadd.f32 %v568, %v641
          %v643 = vpop.f32.mrb[0].mxu0
          %644 = vmatprep.mubr.f32.mxu0 0.0
          %645 = vmatmul.mubr.f32.gmra.mrb[0].mxu0 %v534
          %v646 = vpop.f32.mrb[0].mxu0
          %v647 = vadd.f32 %v568, %v646
          %v648 = vpop.f32.mrb[0].mxu0
          %649 = vmatprep.mubr.f32.mxu0 0.0
          %650 = vmatmul.mubr.f32.gmra.mrb[0].mxu0 %v535
          %v651 = vpop.f32.mrb[0].mxu0
          %v652 = vadd.f32 %v568, %v651
          %v653 = vpop.f32.mrb[0].mxu0
          %654 = vmatprep.mubr.f32.mxu0 0.0
          %655 = vmatmul.mubr.f32.gmra.mrb[0].mxu0 %v536
          %v656 = vpop.f32.mrb[0].mxu0
          %v657 = vadd.f32 %v568, %v656
          %v658 = vpop.f32.mrb[0].mxu0
          %659 = vmatprep.mubr.f32.mxu0 0.0
          %660 = vmatmul.mubr.f32.gmra.mrb[0].mxu0 %v537
          %v661 = vpop.f32.mrb[0].mxu0
          %v662 = vadd.f32 %v568, %v661
          %v663 = vpop.f32.mrb[0].mxu0
          %664 = vmatprep.mubr.f32.mxu0 0.0
          %665 = vmatmul.mubr.f32.gmra.mrb[0].mxu0 %v538
          %v666 = vpop.f32.mrb[0].mxu0
          %v667 = vadd.f32 %v568, %v666
          %v668 = vpop.f32.mrb[0].mxu0
          %669 = vmatprep.mubr.f32.mxu0 0.0
          %670 = vmatmul.mubr.f32.gmra.mrb[0].mxu0 %v539
          %v671 = vpop.f32.mrb[0].mxu0
          %v672 = vadd.f32 %v568, %v671
          %v673 = vpop.f32.mrb[0].mxu0
          %674 = vmatprep.mubr.f32.mxu0 0.0
          %675 = vmatmul.mubr.f32.gmra.mrb[0].mxu0 %v540
          %v676 = vpop.f32.mrb[0].mxu0
          %v677 = vadd.f32 %v568, %v676
          %v678 = vpop.f32.mrb[0].mxu0
          %679 = vmatprep.mubr.f32.mxu0 0.0
          %680 = vmatmul.mubr.f32.gmra.mrb[0].mxu0 %v541
          %v681 = vpop.f32.mrb[0].mxu0
          %v682 = vadd.f32 %v568, %v681
          %v683 = vpop.f32.mrb[0].mxu0
          %684 = vmatprep.mubr.f32.mxu0 0.0
          %685 = vmatmul.mubr.f32.gmra.mrb[0].mxu0 %v542
          %v686 = vpop.f32.mrb[0].mxu0
          %v687 = vadd.f32 %v568, %v686
          %v688 = vpop.f32.mrb[0].mxu0
          %689 = vmatprep.mubr.f32.mxu0 0.0
          %690 = vmatmul.mubr.f32.gmra.mrb[0].mxu0 %v543
          %v691 = vpop.f32.mrb[0].mxu0
          %v692 = vadd.f32 %v568, %v691
          %v693 = vpop.f32.mrb[0].mxu0
          %694 = vmatprep.mubr.f32.mxu0 0.0
          %695 = vmatmul.mubr.f32.gmra.mrb[0].mxu0 %v544
          %v696 = vpop.f32.mrb[0].mxu0
          %v697 = vadd.f32 %v568, %v696
          %v698 = vpop.f32.mrb[0].mxu0
          %699 = vmatprep.mubr.f32.mxu0 0.0
          %700 = vmatmul.mubr.f32.gmra.mrb[0].mxu0 %v545
          %v701 = vpop.f32.mrb[0].mxu0
          %v702 = vadd.f32 %v568, %v701
          %v703 = vpop.f32.mrb[0].mxu0
          %704 = vmatprep.mubr.f32.mxu0 0.0
          %705 = vmatmul.mubr.f32.gmra.mrb[0].mxu0 %v546
          %v706 = vpop.f32.mrb[0].mxu0
          %v707 = vadd.f32 %v568, %v706
          %v708 = vpop.f32.mrb[0].mxu0
          %709 = vmatprep.mubr.f32.mxu0 0.0
          %710 = vmatmul.mubr.f32.gmra.mrb[0].mxu0 %v547
          %v711 = vpop.f32.mrb[0].mxu0
          %v712 = vadd.f32 %v568, %v711
          %v713 = vpop.f32.mrb[0].mxu0
          %714 = vdwg.mxu0
          %s715 = smul.u32 %s26, 128
          %s716 = scalar_lea.vmem [#allocation2], %s715
          %717 = vst [vmem:[%s716] sm:$0xff] %v637
          %718 = vst [vmem:[%s716 + $0x8] sm:$0xff] %v642
          %719 = vst [vmem:[%s716 + $0x10] sm:$0xff] %v647
          %720 = vst [vmem:[%s716 + $0x18] sm:$0xff] %v652
          %721 = vst [vmem:[%s716 + $0x20] sm:$0xff] %v657
          %722 = vst [vmem:[%s716 + $0x28] sm:$0xff] %v662
          %723 = vst [vmem:[%s716 + $0x30] sm:$0xff] %v667
          %724 = vst [vmem:[%s716 + $0x38] sm:$0xff] %v672
          %725 = vst [vmem:[%s716 + $0x40] sm:$0xff] %v677
          %726 = vst [vmem:[%s716 + $0x48] sm:$0xff] %v682
          %727 = vst [vmem:[%s716 + $0x50] sm:$0xff] %v687
          %728 = vst [vmem:[%s716 + $0x58] sm:$0xff] %v692
          %729 = vst [vmem:[%s716 + $0x60] sm:$0xff] %v697
          %730 = vst [vmem:[%s716 + $0x68] sm:$0xff] %v702
          %731 = vst [vmem:[%s716 + $0x70] sm:$0xff] %v707
          %732 = vst [vmem:[%s716 + $0x78] sm:$0xff] %v712
          %p733 = scmp.lt.s32.totalorder %s26, 1
          // Predicated region
          $region49: #{discriminator_forward.1} parent=43 // pred_check
            %p734 = pneg %p733
          $region50: #{discriminator_forward.1} parent=43 // pred_check_branch
            %736 = sbr.rel (%p734) target = $region52
          $region51: #{discriminator_forward.1} parent=43 // pred_region
            %v737 = vld [vmem:[#allocation3] sm:$0x1]
            %v738 = vadd.f32 %v637, %v642
            %v739 = vadd.f32 %v738, %v647
            %v740 = vadd.f32 %v739, %v652
            %v741 = vadd.f32 %v740, %v657
            %v742 = vadd.f32 %v741, %v662
            %v743 = vadd.f32 %v742, %v667
            %v744 = vadd.f32 %v743, %v672
            %v745 = vadd.f32 %v744, %v677
            %v746 = vadd.f32 %v745, %v682
            %v747 = vadd.f32 %v746, %v687
            %v748 = vadd.f32 %v747, %v692
            %v749 = vadd.f32 %v748, %v697
            %v750 = vadd.f32 %v749, %v702
            %v751 = vadd.f32 %v750, %v707
            %v752 = vadd.f32 %v751, %v712
            %v753 = vrot.slane %v752, 4
            %v754 = vadd.f32 %v752, %v753
            %v755 = vrot.slane %v754, 2
            %v756 = vadd.f32 %v754, %v755
            %v757 = vrot.slane %v756, 1
            %v758 = vadd.f32 %v756, %v757
            %v759 = vadd.f32 %v737, %v758
            %760 = vst [vmem:[#allocation3] sm:$0x1] %v759
            %v761 = vld [vmem:[#allocation3 + $0x1] sm:$0x1]
            %v762 = vmul.f32 %v637, %v637
            %v763 = vmul.f32 %v642, %v642
            %v764 = vmul.f32 %v647, %v647
            %v765 = vmul.f32 %v652, %v652
            %v766 = vmul.f32 %v657, %v657
            %v767 = vmul.f32 %v662, %v662
            %v768 = vmul.f32 %v667, %v667
            %v769 = vmul.f32 %v672, %v672
            %v770 = vmul.f32 %v677, %v677
            %v771 = vmul.f32 %v682, %v682
            %v772 = vmul.f32 %v687, %v687
            %v773 = vmul.f32 %v692, %v692
            %v774 = vmul.f32 %v697, %v697
            %v775 = vmul.f32 %v702, %v702
            %v776 = vmul.f32 %v707, %v707
            %v777 = vmul.f32 %v712, %v712
            %v778 = vadd.f32 %v762, %v763
            %v779 = vadd.f32 %v778, %v764
            %v780 = vadd.f32 %v779, %v765
            %v781 = vadd.f32 %v780, %v766
            %v782 = vadd.f32 %v781, %v767
            %v783 = vadd.f32 %v782, %v768
            %v784 = vadd.f32 %v783, %v769
            %v785 = vadd.f32 %v784, %v770
            %v786 = vadd.f32 %v785, %v771
            %v787 = vadd.f32 %v786, %v772
            %v788 = vadd.f32 %v787, %v773
            %v789 = vadd.f32 %v788, %v774
            %v790 = vadd.f32 %v789, %v775
            %v791 = vadd.f32 %v790, %v776
            %v792 = vadd.f32 %v791, %v777
            %v793 = vrot.slane %v792, 4
            %v794 = vadd.f32 %v792, %v793
            %v795 = vrot.slane %v794, 2
            %v796 = vadd.f32 %v794, %v795
            %v797 = vrot.slane %v796, 1
            %v798 = vadd.f32 %v796, %v797
            %v799 = vadd.f32 %v761, %v798
            %800 = vst [vmem:[#allocation3 + $0x1] sm:$0x1] %v799
          $region52: #{discriminator_forward.1} parent=43 // pred_fallthru
            _
          %p801 = scmp.eq.s32.totalorder %s26, 1
          // Predicated region
          $region53: #{discriminator_forward.1} parent=43 // pred_check
            %p802 = pneg %p801
          $region54: #{discriminator_forward.1} parent=43 // pred_check_branch
            %804 = sbr.rel (%p802) target = $region56
          $region55: #{discriminator_forward.1} parent=43 // pred_region
            %v805 = vlaneseq
            %v806 = vshrl.u32 %v805, 7
            %v807 = vadd.s32 %v806, 8
            %v808 = vadd.s32 %v806, 16
            %v809 = vadd.s32 %v806, 24
            %v810 = vadd.s32 %v806, 32
            %v811 = vadd.s32 %v806, 40
            %v812 = vadd.s32 %v806, 48
            %v813 = vadd.s32 %v806, 56
            %v814 = vadd.s32 %v806, 64
            %v815 = vadd.s32 %v806, 72
            %v816 = vadd.s32 %v806, 80
            %v817 = vadd.s32 %v806, 88
            %v818 = vadd.s32 %v806, 96
            %v819 = vadd.s32 %v806, 104
            %v820 = vadd.s32 %v806, 112
            %v821 = vadd.s32 %v806, 120
            %v822 = vstv %s715
            %v823 = vadd.s32 %v806, %v822
            %v824 = vadd.s32 %v807, %v822
            %v825 = vadd.s32 %v808, %v822
            %v826 = vadd.s32 %v809, %v822
            %v827 = vadd.s32 %v810, %v822
            %v828 = vadd.s32 %v811, %v822
            %v829 = vadd.s32 %v812, %v822
            %v830 = vadd.s32 %v813, %v822
            %v831 = vadd.s32 %v814, %v822
            %v832 = vadd.s32 %v815, %v822
            %v833 = vadd.s32 %v816, %v822
            %v834 = vadd.s32 %v817, %v822
            %v835 = vadd.s32 %v818, %v822
            %v836 = vadd.s32 %v819, %v822
            %v837 = vadd.s32 %v820, %v822
            %v838 = vadd.s32 %v821, %v822
            %vm839 = vcmp.lt.s32.totalorder %v823, 200
            %vm840 = vcmp.lt.s32.totalorder %v824, 200
            %vm841 = vcmp.lt.s32.totalorder %v825, 200
            %vm842 = vcmp.lt.s32.totalorder %v826, 200
            %vm843 = vcmp.lt.s32.totalorder %v827, 200
            %vm844 = vcmp.lt.s32.totalorder %v828, 200
            %vm845 = vcmp.lt.s32.totalorder %v829, 200
            %vm846 = vcmp.lt.s32.totalorder %v830, 200
            %vm847 = vcmp.lt.s32.totalorder %v831, 200
            %vm848 = vcmp.lt.s32.totalorder %v832, 200
            %vm849 = vcmp.lt.s32.totalorder %v833, 200
            %vm850 = vcmp.lt.s32.totalorder %v834, 200
            %vm851 = vcmp.lt.s32.totalorder %v835, 200
            %vm852 = vcmp.lt.s32.totalorder %v836, 200
            %vm853 = vcmp.lt.s32.totalorder %v837, 200
            %vm854 = vcmp.lt.s32.totalorder %v838, 200
            %v855 = vsel %vm839, %v637, 0.0
            %v856 = vsel %vm840, %v642, 0.0
            %v857 = vsel %vm841, %v647, 0.0
            %v858 = vsel %vm842, %v652, 0.0
            %v859 = vsel %vm843, %v657, 0.0
            %v860 = vsel %vm844, %v662, 0.0
            %v861 = vsel %vm845, %v667, 0.0
            %v862 = vsel %vm846, %v672, 0.0
            %v863 = vsel %vm847, %v677, 0.0
            %v864 = vsel %vm848, %v682, 0.0
            %v865 = vsel %vm849, %v687, 0.0
            %v866 = vsel %vm850, %v692, 0.0
            %v867 = vsel %vm851, %v697, 0.0
            %v868 = vsel %vm852, %v702, 0.0
            %v869 = vsel %vm853, %v707, 0.0
            %v870 = vsel %vm854, %v712, 0.0
            %v871 = vld [vmem:[#allocation3] sm:$0x1]
            %v872 = vadd.f32 %v855, %v856
            %v873 = vadd.f32 %v872, %v857
            %v874 = vadd.f32 %v873, %v858
            %v875 = vadd.f32 %v874, %v859
            %v876 = vadd.f32 %v875, %v860
            %v877 = vadd.f32 %v876, %v861
            %v878 = vadd.f32 %v877, %v862
            %v879 = vadd.f32 %v878, %v863
            %v880 = vadd.f32 %v879, %v864
            %v881 = vadd.f32 %v880, %v865
            %v882 = vadd.f32 %v881, %v866
            %v883 = vadd.f32 %v882, %v867
            %v884 = vadd.f32 %v883, %v868
            %v885 = vadd.f32 %v884, %v869
            %v886 = vadd.f32 %v885, %v870
            %v887 = vrot.slane %v886, 4
            %v888 = vadd.f32 %v886, %v887
            %v889 = vrot.slane %v888, 2
            %v890 = vadd.f32 %v888, %v889
            %v891 = vrot.slane %v890, 1
            %v892 = vadd.f32 %v890, %v891
            %v893 = vadd.f32 %v871, %v892
            %894 = vst [vmem:[#allocation3] sm:$0x1] %v893
            %v895 = vld [vmem:[#allocation3 + $0x1] sm:$0x1]
            %v896 = vmul.f32 %v855, %v855
            %v897 = vmul.f32 %v856, %v856
            %v898 = vmul.f32 %v857, %v857
            %v899 = vmul.f32 %v858, %v858
            %v900 = vmul.f32 %v859, %v859
            %v901 = vmul.f32 %v860, %v860
            %v902 = vmul.f32 %v861, %v861
            %v903 = vmul.f32 %v862, %v862
            %v904 = vmul.f32 %v863, %v863
            %v905 = vmul.f32 %v864, %v864
            %v906 = vmul.f32 %v865, %v865
            %v907 = vmul.f32 %v866, %v866
            %v908 = vmul.f32 %v867, %v867
            %v909 = vmul.f32 %v868, %v868
            %v910 = vmul.f32 %v869, %v869
            %v911 = vmul.f32 %v870, %v870
            %v912 = vadd.f32 %v896, %v897
            %v913 = vadd.f32 %v912, %v898
            %v914 = vadd.f32 %v913, %v899
            %v915 = vadd.f32 %v914, %v900
            %v916 = vadd.f32 %v915, %v901
            %v917 = vadd.f32 %v916, %v902
            %v918 = vadd.f32 %v917, %v903
            %v919 = vadd.f32 %v918, %v904
            %v920 = vadd.f32 %v919, %v905
            %v921 = vadd.f32 %v920, %v906
            %v922 = vadd.f32 %v921, %v907
            %v923 = vadd.f32 %v922, %v908
            %v924 = vadd.f32 %v923, %v909
            %v925 = vadd.f32 %v924, %v910
            %v926 = vadd.f32 %v925, %v911
            %v927 = vrot.slane %v926, 4
            %v928 = vadd.f32 %v926, %v927
            %v929 = vrot.slane %v928, 2
            %v930 = vadd.f32 %v928, %v929
            %v931 = vrot.slane %v930, 1
            %v932 = vadd.f32 %v930, %v931
            %v933 = vadd.f32 %v895, %v932
            %934 = vst [vmem:[#allocation3 + $0x1] sm:$0x1] %v933
          $region56: #{discriminator_forward.1} parent=43 // pred_fallthru
            _
        $region44: #{discriminator_forward.1} parent=39 // pred_fallthru
          _
        %p935 = scmp.eq.s32.totalorder %s25, 1
        // Predicated region
        $region57: #{discriminator_forward.1} parent=39 // pred_check
          %p936 = pneg %p935
        $region58: #{discriminator_forward.1} parent=39 // pred_check_branch
          %938 = sbr.rel (%p936) target = $region60
        $region59: #{discriminator_forward.1} parent=39 // pred_region
          %p939 = scmp.eq.s32.totalorder %s26, 0
          // Predicated region
          $region61: #{discriminator_forward.1} parent=59 // pred_check
            %p940 = pneg %p939
          $region62: #{discriminator_forward.1} parent=59 // pred_check_branch
            %942 = sbr.rel (%p940) target = $region64
          $region63: #{discriminator_forward.1} parent=59 // pred_region
            %v943 = vld [vmem:[#allocation3] sm:$0x3]
            %v944 = vld [vmem:[%s4] sm:$0x1]
            %v945 = vld [vmem:[%s4 + $0x1] sm:$0x1]
            %v946 = vmul.f32 %v943, 0.005
            %v947 = vmul.f32 %v946, %v946
            %v949 = vrot.slane %v947, 7
            %v951 = vsub.f32 %v946, %v949
            %v952 = vadd.f32 %v951, 1e-05
            %v953 = vrsqrt.pop %v952
            %v955 = vlaneseq
            %v956 = vshrl.u32 %v955, 7
            %v957 = vsub.s32 0, %v956
            %v958 = vrot.slane %v944, %v957
            %v960 = vmul.f32 %v953, %v958
            %v962 = vrot.slane %v960, 1
            %v964 = vmul.f32 %v946, %v962
            %v965 = vsub.f32 %v945, %v964
            %966 = vst [vmem:[#allocation4 - $0x1] sm:$0x2] %v960
            %967 = vst [vmem:[#allocation4 + $0x1] sm:$0x1] %v965
          $region64: #{discriminator_forward.1} parent=59 // pred_fallthru
            _
          %s968 = smul.u32 %s26, 128
          %s969 = scalar_lea.vmem [#allocation2], %s968
          %v970 = vld [vmem:[%s969] sm:$0xff]
          %v971 = vld [vmem:[%s969 + $0x8] sm:$0xff]
          %v972 = vld [vmem:[%s969 + $0x10] sm:$0xff]
          %v973 = vld [vmem:[%s969 + $0x18] sm:$0xff]
          %v974 = vld [vmem:[%s969 + $0x20] sm:$0xff]
          %v975 = vld [vmem:[%s969 + $0x28] sm:$0xff]
          %v976 = vld [vmem:[%s969 + $0x30] sm:$0xff]
          %v977 = vld [vmem:[%s969 + $0x38] sm:$0xff]
          %v978 = vld [vmem:[%s969 + $0x40] sm:$0xff]
          %v979 = vld [vmem:[%s969 + $0x48] sm:$0xff]
          %v980 = vld [vmem:[%s969 + $0x50] sm:$0xff]
          %v981 = vld [vmem:[%s969 + $0x58] sm:$0xff]
          %v982 = vld [vmem:[%s969 + $0x60] sm:$0xff]
          %v983 = vld [vmem:[%s969 + $0x68] sm:$0xff]
          %v984 = vld [vmem:[%s969 + $0x70] sm:$0xff]
          %v985 = vld [vmem:[%s969 + $0x78] sm:$0xff]
          %v986 = vld [vmem:[#allocation4] sm:$0x1]
          %v987 = vld [vmem:[#allocation4 + $0x1] sm:$0x1]
          %v988 = vlaneseq
          %v989 = vshrl.u32 %v988, 7
          %v990 = vsub.s32 0, %v989
          %v991 = vrot.slane %v986, %v990
          %v992 = vmul.f32 %v970, %v991
          %v993 = vmul.f32 %v971, %v991
          %v994 = vmul.f32 %v972, %v991
          %v995 = vmul.f32 %v973, %v991
          %v996 = vmul.f32 %v974, %v991
          %v997 = vmul.f32 %v975, %v991
          %v998 = vmul.f32 %v976, %v991
          %v999 = vmul.f32 %v977, %v991
          %v1000 = vmul.f32 %v978, %v991
          %v1001 = vmul.f32 %v979, %v991
          %v1002 = vmul.f32 %v980, %v991
          %v1003 = vmul.f32 %v981, %v991
          %v1004 = vmul.f32 %v982, %v991
          %v1005 = vmul.f32 %v983, %v991
          %v1006 = vmul.f32 %v984, %v991
          %v1007 = vmul.f32 %v985, %v991
          %v1008 = vlaneseq
          %v1009 = vshrl.u32 %v1008, 7
          %v1010 = vsub.s32 0, %v1009
          %v1011 = vrot.slane %v987, %v1010
          %v1012 = vadd.f32 %v992, %v1011
          %v1013 = vadd.f32 %v993, %v1011
          %v1014 = vadd.f32 %v994, %v1011
          %v1015 = vadd.f32 %v995, %v1011
          %v1016 = vadd.f32 %v996, %v1011
          %v1017 = vadd.f32 %v997, %v1011
          %v1018 = vadd.f32 %v998, %v1011
          %v1019 = vadd.f32 %v999, %v1011
          %v1020 = vadd.f32 %v1000, %v1011
          %v1021 = vadd.f32 %v1001, %v1011
          %v1022 = vadd.f32 %v1002, %v1011
          %v1023 = vadd.f32 %v1003, %v1011
          %v1024 = vadd.f32 %v1004, %v1011
          %v1025 = vadd.f32 %v1005, %v1011
          %v1026 = vadd.f32 %v1006, %v1011
          %v1027 = vadd.f32 %v1007, %v1011
          %vm1028 = vcmp.gt.f32.partialorder %v1012, 0.0
          %vm1029 = vcmp.gt.f32.partialorder %v1013, 0.0
          %vm1030 = vcmp.gt.f32.partialorder %v1014, 0.0
          %vm1031 = vcmp.gt.f32.partialorder %v1015, 0.0
          %vm1032 = vcmp.gt.f32.partialorder %v1016, 0.0
          %vm1033 = vcmp.gt.f32.partialorder %v1017, 0.0
          %vm1034 = vcmp.gt.f32.partialorder %v1018, 0.0
          %vm1035 = vcmp.gt.f32.partialorder %v1019, 0.0
          %vm1036 = vcmp.gt.f32.partialorder %v1020, 0.0
          %vm1037 = vcmp.gt.f32.partialorder %v1021, 0.0
          %vm1038 = vcmp.gt.f32.partialorder %v1022, 0.0
          %vm1039 = vcmp.gt.f32.partialorder %v1023, 0.0
          %vm1040 = vcmp.gt.f32.partialorder %v1024, 0.0
          %vm1041 = vcmp.gt.f32.partialorder %v1025, 0.0
          %vm1042 = vcmp.gt.f32.partialorder %v1026, 0.0
          %vm1043 = vcmp.gt.f32.partialorder %v1027, 0.0
          %v1044 = vmul.f32 %v1012, 0.2
          %v1045 = vmul.f32 %v1013, 0.2
          %v1046 = vmul.f32 %v1014, 0.2
          %v1047 = vmul.f32 %v1015, 0.2
          %v1048 = vmul.f32 %v1016, 0.2
          %v1049 = vmul.f32 %v1017, 0.2
          %v1050 = vmul.f32 %v1018, 0.2
          %v1051 = vmul.f32 %v1019, 0.2
          %v1052 = vmul.f32 %v1020, 0.2
          %v1053 = vmul.f32 %v1021, 0.2
          %v1054 = vmul.f32 %v1022, 0.2
          %v1055 = vmul.f32 %v1023, 0.2
          %v1056 = vmul.f32 %v1024, 0.2
          %v1057 = vmul.f32 %v1025, 0.2
          %v1058 = vmul.f32 %v1026, 0.2
          %v1059 = vmul.f32 %v1027, 0.2
          %v1060 = vsel %vm1028, %v1012, %v1044
          %v1061 = vsel %vm1029, %v1013, %v1045
          %v1062 = vsel %vm1030, %v1014, %v1046
          %v1063 = vsel %vm1031, %v1015, %v1047
          %v1064 = vsel %vm1032, %v1016, %v1048
          %v1065 = vsel %vm1033, %v1017, %v1049
          %v1066 = vsel %vm1034, %v1018, %v1050
          %v1067 = vsel %vm1035, %v1019, %v1051
          %v1068 = vsel %vm1036, %v1020, %v1052
          %v1069 = vsel %vm1037, %v1021, %v1053
          %v1070 = vsel %vm1038, %v1022, %v1054
          %v1071 = vsel %vm1039, %v1023, %v1055
          %v1072 = vsel %vm1040, %v1024, %v1056
          %v1073 = vsel %vm1041, %v1025, %v1057
          %v1074 = vsel %vm1042, %v1026, %v1058
          %v1075 = vsel %vm1043, %v1027, %v1059
          %v1076 = vld [vmem:[%s4 + $0x2] sm:$0x1]
          %v1077 = vld [vmem:[%s4 + $0x3] sm:$0x1]
          %1079 = vset.pattern.permute.xlu0 0
          %1080 = vperm.xlu0 %1079, %v1077
          %v1081 = vpop.permute.xlu0 %1080
          %v1083 = vlaneseq
          %v1084 = vshrl.u32 %v1083, 7
          %v1085 = vsub.s32 0, %v1084
          %v1086 = vrot.slane %v1081, %v1085
          %1087 = vmatprep.subr.mxu0 0.0
          %1088 = vmatpush1.xpose.msra.mxu0 %v1060
          %1089 = vmatprep.subr.mxu0 0.0
          %1090 = vmatpush1.xpose.msra.mxu0 %v1061
          %1091 = vmatprep.subr.mxu0 0.0
          %1092 = vmatpush1.xpose.msra.mxu0 %v1062
          %1093 = vmatprep.subr.mxu0 0.0
          %1094 = vmatpush1.xpose.msra.mxu0 %v1063
          %1095 = vmatprep.subr.mxu0 0.0
          %1096 = vmatpush1.xpose.msra.mxu0 %v1064
          %1097 = vmatprep.subr.mxu0 0.0
          %1098 = vmatpush1.xpose.msra.mxu0 %v1065
          %1099 = vmatprep.subr.mxu0 0.0
          %1100 = vmatpush1.xpose.msra.mxu0 %v1066
          %1101 = vmatprep.subr.mxu0 0.0
          %1102 = vmatpush1.xpose.msra.mxu0 %v1067
          %1103 = vmatprep.subr.mxu0 0.0
          %1104 = vmatpush1.xpose.msra.mxu0 %v1068
          %1105 = vmatprep.subr.mxu0 0.0
          %1106 = vmatpush1.xpose.msra.mxu0 %v1069
          %1107 = vmatprep.subr.mxu0 0.0
          %1108 = vmatpush1.xpose.msra.mxu0 %v1070
          %1109 = vmatprep.subr.mxu0 0.0
          %1110 = vmatpush1.xpose.msra.mxu0 %v1071
          %1111 = vmatprep.subr.mxu0 0.0
          %1112 = vmatpush1.xpose.msra.mxu0 %v1072
          %1113 = vmatprep.subr.mxu0 0.0
          %1114 = vmatpush1.xpose.msra.mxu0 %v1073
          %1115 = vmatprep.subr.mxu0 0.0
          %1116 = vmatpush1.xpose.msra.mxu0 %v1074
          %1117 = vmatprep.subr.mxu0 0.0
          %1118 = vmatpush1.xpose.msra.mxu0 %v1075
          %1119 = vmatprep.subr.mxu0 0.0
          %1120 = vmatpush1.xpose.msra.mxu0 0.0
          %1121 = vmatprep.subr.mxu0 0.0
          %1122 = vmatpush1.xpose.msra.mxu0 0.0
          %1123 = vmatprep.subr.mxu0 0.0
          %1124 = vmatpush1.xpose.msra.mxu0 0.0
          %1125 = vmatprep.subr.mxu0 0.0
          %1126 = vmatpush1.xpose.msra.mxu0 0.0
          %1127 = vmatprep.subr.mxu0 0.0
          %1128 = vmatpush1.xpose.msra.mxu0 0.0
          %1129 = vmatprep.subr.mxu0 0.0
          %1130 = vmatpush1.xpose.msra.mxu0 0.0
          %1131 = vmatprep.subr.mxu0 0.0
          %1132 = vmatpush1.xpose.msra.mxu0 0.0
          %1133 = vmatprep.subr.mxu0 0.0
          %1134 = vmatpush1.xpose.msra.mxu0 0.0
          %1135 = vmatprep.subr.mxu0 0.0
          %1136 = vmatpush1.xpose.msra.mxu0 0.0
          %1137 = vmatprep.subr.mxu0 0.0
          %1138 = vmatpush1.xpose.msra.mxu0 0.0
          %1139 = vmatprep.subr.mxu0 0.0
          %1140 = vmatpush1.xpose.msra.mxu0 0.0
          %1141 = vmatprep.subr.mxu0 0.0
          %1142 = vmatpush1.xpose.msra.mxu0 0.0
          %1143 = vmatprep.subr.mxu0 0.0
          %1144 = vmatpush1.xpose.msra.mxu0 0.0
          %1145 = vmatprep.subr.mxu0 0.0
          %1146 = vmatpush1.xpose.msra.mxu0 0.0
          %1147 = vmatprep.subr.mxu0 0.0
          %1148 = vmatpush1.xpose.msra.mxu0 0.0
          %1149 = vmatprep.subr.mxu0 0.0
          %1150 = vmatpush1.xpose.msra.mxu0 0.0
          %1151 = vmatprep.mubr.f32.mxu0 0.0
          %1152 = vmatmul.mubr.f32.gmra.mrb[0].mxu0 %v1076
          %v1153 = vpop.f32.mrb[0].mxu0
          %v1154 = vadd.f32 %v1086, %v1153
          %v1155 = vpop.f32.mrb[0].mxu0
          %1156 = vdwg.mxu0
          %1157 = vst [vmem:[%s302] sm:$0xff] %v1060
          %1158 = vst [vmem:[%s302 + $0x8] sm:$0xff] %v1061
          %1159 = vst [vmem:[%s302 + $0x10] sm:$0xff] %v1062
          %1160 = vst [vmem:[%s302 + $0x18] sm:$0xff] %v1063
          %1161 = vst [vmem:[%s302 + $0x20] sm:$0xff] %v1064
          %1162 = vst [vmem:[%s302 + $0x28] sm:$0xff] %v1065
          %1163 = vst [vmem:[%s302 + $0x30] sm:$0xff] %v1066
          %1164 = vst [vmem:[%s302 + $0x38] sm:$0xff] %v1067
          %1165 = vst [vmem:[%s302 + $0x40] sm:$0xff] %v1068
          %1166 = vst [vmem:[%s302 + $0x48] sm:$0xff] %v1069
          %1167 = vst [vmem:[%s302 + $0x50] sm:$0xff] %v1070
          %1168 = vst [vmem:[%s302 + $0x58] sm:$0xff] %v1071
          %1169 = vst [vmem:[%s302 + $0x60] sm:$0xff] %v1072
          %1170 = vst [vmem:[%s302 + $0x68] sm:$0xff] %v1073
          %1171 = vst [vmem:[%s302 + $0x70] sm:$0xff] %v1074
          %1172 = vst [vmem:[%s302 + $0x78] sm:$0xff] %v1075
          %1173 = vst [vmem:[%s284] sm:$0x1] %v1154
        $region60: #{discriminator_forward.1} parent=39 // pred_fallthru
          _
        %s1174 = smul.u32 %s26, %s25
        %s1175 = smul.u32 16, %s1174
        %p1176 = scmp.lt.s32.totalorder %s1175, 31
        %s1177 = scalar_select %p1176, %s1175, 31
        %s1178 = smul.addr %s1177, 8
        %s1179 = scalar_lea.vmem %s5, %s1178
        %s1180 = sand.u32 %s187, 1
        %s1181 = scalar_lea.sflag [#allocation6], %s1180
        %s1182 = sand.u32 %s187, 1
        %s1183 = scalar_lea.vmem [#allocation5], %s1182
        // Predicated region
        $region65: #{discriminator_forward.1} parent=39 // pred_check
          %p1184 = pneg %p169
        $region66: #{discriminator_forward.1} parent=39 // pred_check_branch
          %1186 = sbr.rel (%p1184) target = $region68
        $region67: #{discriminator_forward.1} parent=39 // pred_region
          %s1187 = smul.u32 %s26, %s25
          %s1188 = smul.u32 16, %s1187
        $region68: #{discriminator_forward.1} parent=39 // pred_fallthru
          _
        // Predicated region
        $region69: #{discriminator_forward.1} parent=39 // pred_check
          %p1189 = pneg %p197
        $region70: #{discriminator_forward.1} parent=39 // pred_check_branch
          %1191 = sbr.rel (%p1189) target = $region72
        $region71: #{discriminator_forward.1} parent=39 // pred_region
          %s1192 = smul.u32 %s26, %s25
          %s1194 = ssub.s32 16, 16
          %1195 = vsyncadd %s1181, %s1194
          %s1196 = smul.addr %s1192, 16
          %s1197 = scalar_lea.hbm %s6, %s1196
          %s1199 = sshll.u32 %s1183, 4
          %s1200 = int_to_ptr.vmem [resolvable:$true] %s1199
          %1202 = dma.vmem_to_hbm [thread:$0]  %s1200, 16, %s1197, %s1181
        $region72: #{discriminator_forward.1} parent=39 // pred_fallthru
          _
      $region40: #{discriminator_forward.1} parent=5 // pred_fallthru
        _
      %p1203 = scmp.le.s32.totalorder 2, %s16
      // Predicated region
      $region73: #{discriminator_forward.1} parent=5 // pred_check
        %p1204 = pneg %p1203
      $region74: #{discriminator_forward.1} parent=5 // pred_check_branch
        %1206 = sbr.rel (%p1204) target = $region76
      $region75: #{discriminator_forward.1} parent=5 // pred_region
        %s1207 = ssub.s32 %s16, 2
        // Predicated region
        $region77: #{discriminator_forward.1} parent=75 // pred_check
          %p1208 = pneg %p175
        $region78: #{discriminator_forward.1} parent=75 // pred_check_branch
          %1210 = sbr.rel (%p1208) target = $region80
        $region79: #{discriminator_forward.1} parent=75 // pred_region
          %s1211 = smul.u32 %s28, %s27
          %s1212 = smul.u32 16, %s1211
          %p1213 = scmp.lt.s32.totalorder %s1212, 31
          %s1214 = scalar_select %p1213, %s1212, 31
          %s1215 = smul.addr %s1214, 8
          %s1216 = scalar_lea.vmem %s5, %s1215
        $region80: #{discriminator_forward.1} parent=75 // pred_fallthru
          _
        // Predicated region
        $region81: #{discriminator_forward.1} parent=75 // pred_check
          %p1217 = pneg %p203
        $region82: #{discriminator_forward.1} parent=75 // pred_check_branch
          %1219 = sbr.rel (%p1217) target = $region84
        $region83: #{discriminator_forward.1} parent=75 // pred_region
          %s1220 = sand.u32 %s188, 1
          %s1221 = scalar_lea.sflag [#allocation6], %s1220
          %s1222 = sand.u32 %s188, 1
          %s1223 = scalar_lea.vmem [#allocation5], %s1222
          %1224 = dma.done %s1221, 16
        $region84: #{discriminator_forward.1} parent=75 // pred_fallthru
          _
      $region76: #{discriminator_forward.1} parent=5 // pred_fallthru
        _
    $region6: #{discriminator_forward.1} parent=1 // loop_footer
      %s20 = sadd.s32 1, %s16
    $region7: #{discriminator_forward.1} parent=1 // loop_footer_branch
      %15 = sbr.rel target = $region3
    $region8: #{discriminator_forward.1} parent=1 // loop_exit
      _
    %1225 = vsyncpa [#allocation6], 1
    %s1226 = scalar_lea.sflag [#allocation6], 1
    %1227 = vsyncpa %s1226, 1

</llo_original>
